<compile_context>
chip_gen: v5e
topology: v5e:2x2
jax: 0.10.0
libtpu: 0.0.40
codegen_flags: <defaults>
</compile_context>

<pallas_src>
import functools

import jax
import jax.numpy as jnp
from jax.experimental import pallas as pl
from jax.experimental.pallas import tpu as pltpu


def _round_up(x, m):
    return (x + m - 1) // m * m


def _largest_tile(extent, prefer=(512, 256, 128)):
    for t in prefer:
        if extent % t == 0:
            return t
    return prefer[-1]


def _pick_tile_m(extent, prefer=(512, 256, 128)):
    # Largest tile dividing `extent`, preferring >=2 tiles so both v7x
    # TensorCores get work (costs nothing on single-TC v5e/v6e).
    for t in prefer:
        if extent % t == 0 and extent // t >= 2:
            return t
    for t in prefer:
        if extent % t == 0:
            return t
    return prefer[-1]


# ----------------------------------------------------------------------------
# Kernel 1: whole-K resident-weight matmul + folded-BN (+ ReLU) epilogue.
# Used for the strided 3x3 conv1 (explicit im2col) and the 1x1 shortcut.
# ----------------------------------------------------------------------------
def _matmul_bn_kernel(relu, x_ref, w_ref, s_ref, b_ref, o_ref):
    acc = jnp.dot(x_ref[...], w_ref[...], preferred_element_type=jnp.float32)
    acc = acc * s_ref[...] + b_ref[...]
    if relu:
        acc = jnp.maximum(acc, 0.0)
    o_ref[...] = acc.astype(o_ref.dtype)


def matmul_bn_pallas(x, w, scale, bias, *, relu, out_dtype):
    """x: (M, K) patches, w: (K, Cout), scale/bias: (Cout,) f32.
    Returns (M, Cout_pad) with Cout_pad = round_up(Cout, 128); the padded
    output channels are exactly zero (zero weight cols, zero scale/bias)."""
    x = x.astype(jnp.bfloat16)
    w = w.astype(jnp.bfloat16)
    M, K = x.shape
    Cout = w.shape[1]

    M_pad = _round_up(M, 128)
    K_pad = _round_up(K, 128)           # was round_up(K, 512): no dead K work
    Cout_pad = _round_up(Cout, 128)     # lane-dense output stores

    tm = _pick_tile_m(M_pad)
    tn = _largest_tile(Cout_pad)
    out_isz = jnp.dtype(out_dtype).itemsize

    def block_bytes(tm_):
        # double-buffered blocks + epilogue temps (true dtypes)
        return (2 * (tm_ * K_pad * 2 + K_pad * tn * 2 + tm_ * tn * out_isz)
                + 2 * tm_ * tn * 4 + 4 * 4 * tn)

    # Keep the whole-K blocks inside a budget that also fits v7x (64 MiB VMEM).
    while tm > 128 and block_bytes(tm) > 24 * 1024 * 1024:
        tm //= 2

    def pad2(a, rows, cols):
        pr, pc = rows - a.shape[0], cols - a.shape[1]
        return jnp.pad(a, ((0, pr), (0, pc))) if (pr or pc) else a

    x_p = pad2(x, M_pad, K_pad)
    w_p = pad2(w, K_pad, Cout_pad)
    s_p = pad2(scale.astype(jnp.float32).reshape(1, Cout), 1, Cout_pad)
    b_p = pad2(bias.astype(jnp.float32).reshape(1, Cout), 1, Cout_pad)

    flops = 2 * M_pad * K_pad * Cout_pad
    bytes_accessed = int(sum(a.size * a.dtype.itemsize
                             for a in (x_p, w_p, s_p, b_p))
                         + M_pad * Cout_pad * out_isz)
    vmem_limit = int(min(48 * 1024 * 1024,
                         max(8 * 1024 * 1024, 2 * block_bytes(tm))))

    out = pl.pallas_call(
        functools.partial(_matmul_bn_kernel, relu),
        out_shape=jax.ShapeDtypeStruct((M_pad, Cout_pad), out_dtype),
        # M innermost: the weight stripe's block index is constant across i,
        # so it is DMA'd once per output-column stripe.
        grid=(Cout_pad // tn, M_pad // tm),
        in_specs=[
            pl.BlockSpec((tm, K_pad), lambda j, i: (i, 0)),
            pl.BlockSpec((K_pad, tn), lambda j, i: (0, j)),
            pl.BlockSpec((1, tn), lambda j, i: (0, j)),
            pl.BlockSpec((1, tn), lambda j, i: (0, j)),
        ],
        out_specs=pl.BlockSpec((tm, tn), lambda j, i: (i, j)),
        compiler_params=pltpu.CompilerParams(
            dimension_semantics=("parallel", "parallel"),
            vmem_limit_bytes=vmem_limit),
        cost_estimate=pl.CostEstimate(flops=flops, transcendentals=0,
                                      bytes_accessed=bytes_accessed),
    )(x_p, w_p, s_p, b_p)

    return out[:M] if M_pad != M else out


# ----------------------------------------------------------------------------
# Kernel 2: implicit-im2col 3x3 stride-1 conv + folded BN [+ f32 residual]
# [+ ReLU].  One image per block; 9 accumulating matmuls over shifted row
# windows of the zero-extended flat image (no HBM patch matrix).
# ----------------------------------------------------------------------------
def _conv3x3_bn_kernel(relu, has_res, H, W, C, *refs):
    if has_res:
        x_ref, w_ref, s_ref, b_ref, r_ref, o_ref = refs
    else:
        x_ref, w_ref, s_ref, b_ref, o_ref = refs
        r_ref = None

    HW = H * W
    wo = jax.lax.broadcasted_iota(jnp.int32, (HW, 1), 0) % W

    acc = None
    for ki in range(3):
        for kj in range(3):
            di, dj = ki - 1, kj - 1
            # x_ref holds one image, row-major over (H, W), zero-extended by
            # (W+1) rows at each end -> every tap is a contiguous static row
            # window; only the horizontal (dj != 0) border wrap needs masking,
            # vertical overflow already lands in the zero rows.
            start = (di + 1) * W + (dj + 1)
            xt = x_ref[0, start:start + HW, :]            # (HW, C) bf16
            if dj != 0:
                valid = (wo + dj >= 0) & (wo + dj < W)
                xt = jnp.where(valid, xt, jnp.zeros_like(xt))
            t = ki * 3 + kj
            wt = w_ref[t * C:(t + 1) * C, :]              # resident weight tap
            part = jnp.dot(xt, wt, preferred_element_type=jnp.float32)
            acc = part if acc is None else acc + part

    acc = acc * s_ref[...] + b_ref[...]
    if has_res:
        acc = acc + r_ref[0, :, :].astype(jnp.float32)    # f32 residual add
    if relu:
        acc = jnp.maximum(acc, 0.0)
    o_ref[0, :, :] = acc.astype(o_ref.dtype)


def conv3x3_bn_pallas(x_flat, H, W, w, scale, bias, residual=None, *,
                      relu, out_dtype):
    """x_flat: (N, H*W, C) NHWC activations flattened over (H, W), bf16.
    w: (9*C, Cout), tap-major (ki, kj, c) rows.
    residual: optional (N, H*W, Cout_pad), added in f32 before the ReLU.
    Returns (N, H*W, Cout_pad) with Cout_pad = round_up(Cout, 128)."""
    x_flat = x_flat.astype(jnp.bfloat16)
    w = w.astype(jnp.bfloat16)
    N, HW, C = x_flat.shape
    assert HW == H * W and w.shape[0] == 9 * C
    Cout = w.shape[1]
    Cout_pad = _round_up(Cout, 128)

    tn = _largest_tile(Cout_pad)
    if N * (Cout_pad // tn) < 2 and tn > 128:
        tn //= 2                                   # keep both v7x TCs busy
    out_isz = jnp.dtype(out_dtype).itemsize

    # zero-extend each flat image by (W+1) rows top & bottom.
    x_ext = jnp.pad(x_flat, ((0, 0), (W + 1, W + 1), (0, 0)))
    Hext = HW + 2 * W + 2

    w_p = jnp.pad(w, ((0, 0), (0, Cout_pad - Cout)))
    s_p = jnp.pad(scale.astype(jnp.float32).reshape(1, Cout),
                  ((0, 0), (0, Cout_pad - Cout)))
    b_p = jnp.pad(bias.astype(jnp.float32).reshape(1, Cout),
                  ((0, 0), (0, Cout_pad - Cout)))

    has_res = residual is not None
    in_specs = [
        pl.BlockSpec((1, Hext, C), lambda j, n: (n, 0, 0)),
        pl.BlockSpec((9 * C, tn), lambda j, n: (0, j)),
        pl.BlockSpec((1, tn), lambda j, n: (0, j)),
        pl.BlockSpec((1, tn), lambda j, n: (0, j)),
    ]
    args = [x_ext, w_p, s_p, b_p]
    if has_res:
        in_specs.append(pl.BlockSpec((1, HW, tn), lambda j, n: (n, 0, j)))
        args.append(residual.astype(jnp.float32))

    flops = 2 * N * HW * 9 * C * Cout_pad
    bytes_accessed = int(sum(a.size * a.dtype.itemsize for a in args)
                         + N * HW * Cout_pad * out_isz)
    blk_bytes = (2 * (Hext * C * 2 + 9 * C * tn * 2 + HW * tn * out_isz
                      + (HW * tn * 4 if has_res else 0))
                 + 2 * HW * tn * 4 + 2 * HW * C * 2)
    vmem_limit = int(min(48 * 1024 * 1024,
                         max(8 * 1024 * 1024, 2 * blk_bytes)))

    out = pl.pallas_call(
        functools.partial(_conv3x3_bn_kernel, relu, has_res, H, W, C),
        out_shape=jax.ShapeDtypeStruct((N, HW, Cout_pad), out_dtype),
        # images innermost: weight/scale/bias blocks stay resident across n.
        grid=(Cout_pad // tn, N),
        in_specs=in_specs,
        out_specs=pl.BlockSpec((1, HW, tn), lambda j, n: (n, 0, j)),
        compiler_params=pltpu.CompilerParams(
            dimension_semantics=("parallel", "parallel"),
            vmem_limit_bytes=vmem_limit),
        cost_estimate=pl.CostEstimate(flops=flops, transcendentals=0,
                                      bytes_accessed=bytes_accessed),
    )(*args)
    return out


# ----------------------------------------------------------------------------
# Glue (plain JAX): im2col (strided conv only), weight reordering, BN folding
# ----------------------------------------------------------------------------
def im2col(x_nhwc, kh, kw, stride, pad):
    """(N, H, W, C) -> (N*Ho*Wo, kh*kw*C), feature order (kh, kw, C)."""
    N, H, W, C = x_nhwc.shape
    xp = jnp.pad(x_nhwc, ((0, 0), (pad, pad), (pad, pad), (0, 0)))
    Ho = (H + 2 * pad - kh) // stride + 1
    Wo = (W + 2 * pad - kw) // stride + 1
    cols = []
    for i in range(kh):
        for j in range(kw):
            cols.append(xp[:, i:i + stride * Ho:stride,
                           j:j + stride * Wo:stride, :])
    patches = jnp.concatenate(cols, axis=-1)
    return patches.reshape(N * Ho * Wo, kh * kw * C)


def reorder_weight(w_oihw, cin_pad=None):
    """(Cout, Cin, KH, KW) -> (KH*KW*Cin_pad, Cout), tap-major rows, with the
    input channels optionally zero-padded to cin_pad."""
    Cout, Cin, KH, KW = w_oihw.shape
    w = jnp.transpose(w_oihw, (2, 3, 1, 0))            # (KH, KW, Cin, Cout)
    if cin_pad is not None and cin_pad != Cin:
        w = jnp.pad(w, ((0, 0), (0, 0), (0, cin_pad - Cin), (0, 0)))
        Cin = cin_pad
    return w.reshape(KH * KW * Cin, Cout)


def fold_bn(gamma, beta, mean, var, eps=1e-5):
    scale = gamma / jnp.sqrt(var + eps)
    bias = beta - mean * scale
    return scale, bias


# ----------------------------------------------------------------------------
# BasicBlock forward (eval-mode BatchNorm: running stats)
# ----------------------------------------------------------------------------
def basic_block_forward(x_nchw, params, stride):
    N, Cin, H, W = x_nchw.shape
    planes = params["w1"].shape[0]
    Ho = (H - 1) // stride + 1
    Wo = (W - 1) // stride + 1
    Cp = _round_up(planes, 128)          # channel-padded width between kernels

    x_nhwc = jnp.transpose(x_nchw, (0, 2, 3, 1))
    x_bf = x_nhwc.astype(jnp.bfloat16)   # cast once, BEFORE im2col / padding

    s1, b1 = fold_bn(*params["bn1"])
    s2, b2 = fold_bn(*params["bn2"])

    # conv1 (3x3, stride) + bn1 + relu -> (N, Ho*Wo, Cp) bf16 (pad lanes are 0)
    if stride == 1:
        out1 = conv3x3_bn_pallas(x_bf.reshape(N, H * W, Cin), H, W,
                                 reorder_weight(params["w1"]), s1, b1,
                                 relu=True, out_dtype=jnp.bfloat16)
    else:
        p1 = im2col(x_bf, 3, 3, stride, 1)
        out1 = matmul_bn_pallas(p1, reorder_weight(params["w1"]), s1, b1,
                                relu=True, out_dtype=jnp.bfloat16)
        out1 = out1.reshape(N, Ho * Wo, Cp)

    # shortcut -> f32 residual (N, Ho*Wo, Cp)
    if stride != 1 or Cin != planes:
        ssc, bsc = fold_bn(*params["bn_sc"])
        # TODO(synk): express this strided row selection via a strided
        #             index_map / pl.ds instead of a wrapper-side slice.
        x_str = x_bf[:, ::stride, ::stride, :].reshape(N * Ho * Wo, Cin)
        w_sc = params["w_sc"].reshape(planes, Cin).T      # (Cin, Cout)
        res = matmul_bn_pallas(x_str, w_sc, ssc, bsc,
                               relu=False, out_dtype=jnp.float32)
        res = res.reshape(N, Ho * Wo, Cp)
    else:
        res = jnp.pad(x_nhwc.astype(jnp.float32),
                      ((0, 0), (0, 0), (0, 0), (0, Cp - Cin)))
        res = res.reshape(N, H * W, Cp)

    # conv2 (3x3, stride 1) + bn2 + residual + relu, implicit im2col over the
    # channel-padded out1 (zero weight rows for the padded input channels).
    out2 = conv3x3_bn_pallas(out1, Ho, Wo,
                             reorder_weight(params["w2"], cin_pad=Cp), s2, b2,
                             residual=res, relu=True, out_dtype=jnp.float32)

    out = out2.reshape(N, Ho, Wo, Cp)[:, :, :, :planes]
    return jnp.transpose(out, (0, 3, 1, 2))               # back to NCHW


# ----------------------------------------------------------------------------
# Pure-JAX reference (numerical validation)
# ----------------------------------------------------------------------------
def ref_forward(x, params, stride, eps=1e-5):
    def conv(x, w, s):
        pad = ((1, 1), (1, 1)) if w.shape[-1] == 3 else ((0, 0), (0, 0))
        return jax.lax.conv_general_dilated(
            x, w, (s, s), pad, dimension_numbers=("NCHW", "OIHW", "NCHW"),
            precision=jax.lax.Precision.HIGHEST)

    def bn(y, p):
        g, b, m, v = p
        inv = g / jnp.sqrt(v + eps)
        return y * inv[None, :, None, None] + (b - m * inv)[None, :, None, None]

    out = jax.nn.relu(bn(conv(x, params["w1"], stride), params["bn1"]))
    out = bn(conv(out, params["w2"], 1), params["bn2"])
    in_planes, planes = x.shape[1], params["w1"].shape[0]
    if stride != 1 or in_planes != planes:
        sc = bn(conv(x, params["w_sc"], stride), params["bn_sc"])
    else:
        sc = x
    return jax.nn.relu(out + sc)


# ----------------------------------------------------------------------------
if __name__ == "__main__":
    key = jax.random.PRNGKey(0)

    def bn_params(k, c):
        k1, k2, k3, k4 = jax.random.split(k, 4)
        gamma = jax.random.uniform(k1, (c,), jnp.float32, 0.5, 1.5)
        beta = 0.1 * jax.random.normal(k2, (c,), jnp.float32)
        mean = 0.1 * jax.random.normal(k3, (c,), jnp.float32)
        var = jax.random.uniform(k4, (c,), jnp.float32, 0.5, 1.5)
        return (gamma, beta, mean, var)

    def make_params(k, in_planes, planes):
        ks = jax.random.split(k, 6)
        return {
            "w1": 0.3 * jax.random.normal(ks[0], (planes, in_planes, 3, 3),
                                          jnp.float32),
            "bn1": bn_params(ks[1], planes),
            "w2": 0.3 * jax.random.normal(ks[2], (planes, planes, 3, 3),
                                          jnp.float32),
            "bn2": bn_params(ks[3], planes),
            "w_sc": 0.3 * jax.random.normal(ks[4], (planes, in_planes, 1, 1),
                                            jnp.float32),
            "bn_sc": bn_params(ks[5], planes),
        }

    fwd = jax.jit(basic_block_forward, static_argnums=(2,))

    # Case 1: downsampling block (stride 2, projection shortcut):
    # explicit-im2col conv1 + 1x1 shortcut + implicit-im2col conv2.
    k1, k2, key = jax.random.split(key, 3)
    x = jax.random.normal(k1, (2, 4, 16, 16), jnp.float32)
    p = make_params(k2, 4, 8)
    out = jax.block_until_ready(fwd(x, p, 2))
    ref = jax.block_until_ready(ref_forward(x, p, 2))
    assert out.shape == ref.shape == (2, 8, 8, 8)
    assert jnp.allclose(out, ref, rtol=5e-2, atol=1e-1), (
        float(jnp.max(jnp.abs(out - ref))))

    # Case 2: identity block (stride 1): implicit-im2col conv1/conv2 with an
    # f32 identity residual.
    k1, k2, key = jax.random.split(key, 3)
    x = jax.random.normal(k1, (2, 8, 16, 16), jnp.float32)
    p = make_params(k2, 8, 8)
    out = jax.block_until_ready(fwd(x, p, 1))
    ref = jax.block_until_ready(ref_forward(x, p, 1))
    assert out.shape == ref.shape == (2, 8, 16, 16)
    assert jnp.allclose(out, ref, rtol=5e-2, atol=1e-1), (
        float(jnp.max(jnp.abs(out - ref))))

    print("KERNEL_OK")
</pallas_src>

<mosaic_0001>
module attributes {stable_mosaic.version = 11 : i64} {
  func.func @_matmul_bn_kernel(%arg0: i32, %arg1: i32, %arg2: memref<128x128xbf16, #tpu.memory_space<vmem>>, %arg3: memref<128x128xbf16, #tpu.memory_space<vmem>>, %arg4: memref<1x128xf32, #tpu.memory_space<vmem>>, %arg5: memref<1x128xf32, #tpu.memory_space<vmem>>, %arg6: memref<128x128xbf16, #tpu.memory_space<vmem>>) attributes {dimension_semantics = [#tpu.dimension_semantics<parallel>, #tpu.dimension_semantics<parallel>], iteration_bounds = array<i64: 1, 1>, scalar_prefetch = 0 : i64, scratch_operands = 0 : i64, tpu.core_type = #tpu.core_type<tc>, window_params = [{transform_indices = @transform_0, window_bounds = array<i64: 128, 128>}, {transform_indices = @transform_1, window_bounds = array<i64: 128, 128>}, {transform_indices = @transform_2, window_bounds = array<i64: 1, 128>}, {transform_indices = @transform_3, window_bounds = array<i64: 1, 128>}, {transform_indices = @transform_4, window_bounds = array<i64: 128, 128>}]} {
    %c0 = arith.constant 0 : index
    %c0_0 = arith.constant 0 : index
    %0 = vector.load %arg2[%c0, %c0_0] : memref<128x128xbf16, #tpu.memory_space<vmem>>, vector<128x128xbf16>
    %c0_1 = arith.constant 0 : index
    %c0_2 = arith.constant 0 : index
    %1 = vector.load %arg3[%c0_1, %c0_2] : memref<128x128xbf16, #tpu.memory_space<vmem>>, vector<128x128xbf16>
    %cst = arith.constant dense<0.000000e+00> : vector<128x128xf32>
    %2 = tpu.matmul %0, %1, %cst {dimension_numbers = #tpu.dot_dimension_numbers<[1], [0], [0], [1], [0, 0, 1, 1], [], []>} : vector<128x128xbf16>, vector<128x128xbf16>, vector<128x128xf32> -> vector<128x128xf32>
    %c0_3 = arith.constant 0 : index
    %c0_4 = arith.constant 0 : index
    %3 = vector.load %arg4[%c0_3, %c0_4] : memref<1x128xf32, #tpu.memory_space<vmem>>, vector<1x128xf32>
    %4 = vector.broadcast %3 : vector<1x128xf32> to vector<128x128xf32>
    %5 = arith.mulf %2, %4 : vector<128x128xf32>
    %c0_5 = arith.constant 0 : index
    %c0_6 = arith.constant 0 : index
    %6 = vector.load %arg5[%c0_5, %c0_6] : memref<1x128xf32, #tpu.memory_space<vmem>>, vector<1x128xf32>
    %7 = vector.broadcast %6 : vector<1x128xf32> to vector<128x128xf32>
    %8 = arith.addf %5, %7 : vector<128x128xf32>
    %cst_7 = arith.constant 0.000000e+00 : f32
    %9 = vector.broadcast %cst_7 : f32 to vector<128x128xf32>
    %10 = arith.maximumf %8, %9 : vector<128x128xf32>
    %11 = arith.truncf %10 : vector<128x128xf32> to vector<128x128xbf16>
    %c0_8 = arith.constant 0 : index
    %c0_9 = arith.constant 0 : index
    %12 = vector.load %arg6[%c0_8, %c0_9] : memref<128x128xbf16, #tpu.memory_space<vmem>>, vector<128x128xbf16>
    tpu.vector_store %arg6[%c0_8, %c0_9], %11 {strides = array<i32>} : memref<128x128xbf16, #tpu.memory_space<vmem>>, vector<128x128xbf16>,
    return
  }
  func.func @transform_0(%arg0: i32, %arg1: i32) -> (i32, i32) {
    %c0_i32 = arith.constant 0 : i32
    %c0_i32_0 = arith.constant 0 : i32
    return %arg1, %c0_i32 : i32, i32
  }
  func.func @transform_1(%arg0: i32, %arg1: i32) -> (i32, i32) {
    %c0_i32 = arith.constant 0 : i32
    %c0_i32_0 = arith.constant 0 : i32
    return %c0_i32, %arg0 : i32, i32
  }
  func.func @transform_2(%arg0: i32, %arg1: i32) -> (i32, i32) {
    %c0_i32 = arith.constant 0 : i32
    %c0_i32_0 = arith.constant 0 : i32
    return %c0_i32, %arg0 : i32, i32
  }
  func.func @transform_3(%arg0: i32, %arg1: i32) -> (i32, i32) {
    %c0_i32 = arith.constant 0 : i32
    %c0_i32_0 = arith.constant 0 : i32
    return %c0_i32, %arg0 : i32, i32
  }
  func.func @transform_4(%arg0: i32, %arg1: i32) -> (i32, i32) {
    %c0_i32 = arith.constant 0 : i32
    return %arg1, %arg0 : i32, i32
  }
}

module attributes {stable_mosaic.version = 11 : i64} {
  func.func @_matmul_bn_kernel(%arg0: i32, %arg1: i32, %arg2: memref<128x128xbf16, #tpu.memory_space<vmem>>, %arg3: memref<128x128xbf16, #tpu.memory_space<vmem>>, %arg4: memref<1x128xf32, #tpu.memory_space<vmem>>, %arg5: memref<1x128xf32, #tpu.memory_space<vmem>>, %arg6: memref<128x128xf32, #tpu.memory_space<vmem>>) attributes {dimension_semantics = [#tpu.dimension_semantics<parallel>, #tpu.dimension_semantics<parallel>], iteration_bounds = array<i64: 1, 1>, scalar_prefetch = 0 : i64, scratch_operands = 0 : i64, tpu.core_type = #tpu.core_type<tc>, window_params = [{transform_indices = @transform_0, window_bounds = array<i64: 128, 128>}, {transform_indices = @transform_1, window_bounds = array<i64: 128, 128>}, {transform_indices = @transform_2, window_bounds = array<i64: 1, 128>}, {transform_indices = @transform_3, window_bounds = array<i64: 1, 128>}, {transform_indices = @transform_4, window_bounds = array<i64: 128, 128>}]} {
    %c0 = arith.constant 0 : index
    %c0_0 = arith.constant 0 : index
    %0 = vector.load %arg2[%c0, %c0_0] : memref<128x128xbf16, #tpu.memory_space<vmem>>, vector<128x128xbf16>
    %c0_1 = arith.constant 0 : index
    %c0_2 = arith.constant 0 : index
    %1 = vector.load %arg3[%c0_1, %c0_2] : memref<128x128xbf16, #tpu.memory_space<vmem>>, vector<128x128xbf16>
    %cst = arith.constant dense<0.000000e+00> : vector<128x128xf32>
    %2 = tpu.matmul %0, %1, %cst {dimension_numbers = #tpu.dot_dimension_numbers<[1], [0], [0], [1], [0, 0, 1, 1], [], []>} : vector<128x128xbf16>, vector<128x128xbf16>, vector<128x128xf32> -> vector<128x128xf32>
    %c0_3 = arith.constant 0 : index
    %c0_4 = arith.constant 0 : index
    %3 = vector.load %arg4[%c0_3, %c0_4] : memref<1x128xf32, #tpu.memory_space<vmem>>, vector<1x128xf32>
    %4 = vector.broadcast %3 : vector<1x128xf32> to vector<128x128xf32>
    %5 = arith.mulf %2, %4 : vector<128x128xf32>
    %c0_5 = arith.constant 0 : index
    %c0_6 = arith.constant 0 : index
    %6 = vector.load %arg5[%c0_5, %c0_6] : memref<1x128xf32, #tpu.memory_space<vmem>>, vector<1x128xf32>
    %7 = vector.broadcast %6 : vector<1x128xf32> to vector<128x128xf32>
    %8 = arith.addf %5, %7 : vector<128x128xf32>
    %c0_7 = arith.constant 0 : index
    %c0_8 = arith.constant 0 : index
    %9 = vector.load %arg6[%c0_7, %c0_8] : memref<128x128xf32, #tpu.memory_space<vmem>>, vector<128x128xf32>
    tpu.vector_store %arg6[%c0_7, %c0_8], %8 {strides = array<i32>} : memref<128x128xf32, #tpu.memory_space<vmem>>, vector<128x128xf32>,
    return
  }
  func.func @transform_0(%arg0: i32, %arg1: i32) -> (i32, i32) {
    %c0_i32 = arith.constant 0 : i32
    %c0_i32_0 = arith.constant 0 : i32
    return %arg1, %c0_i32 : i32, i32
  }
  func.func @transform_1(%arg0: i32, %arg1: i32) -> (i32, i32) {
    %c0_i32 = arith.constant 0 : i32
    %c0_i32_0 = arith.constant 0 : i32
    return %c0_i32, %arg0 : i32, i32
  }
  func.func @transform_2(%arg0: i32, %arg1: i32) -> (i32, i32) {
    %c0_i32 = arith.constant 0 : i32
    %c0_i32_0 = arith.constant 0 : i32
    return %c0_i32, %arg0 : i32, i32
  }
  func.func @transform_3(%arg0: i32, %arg1: i32) -> (i32, i32) {
    %c0_i32 = arith.constant 0 : i32
    %c0_i32_0 = arith.constant 0 : i32
    return %c0_i32, %arg0 : i32, i32
  }
  func.func @transform_4(%arg0: i32, %arg1: i32) -> (i32, i32) {
    %c0_i32 = arith.constant 0 : i32
    return %arg1, %arg0 : i32, i32
  }
}

module attributes {stable_mosaic.version = 11 : i64} {
  func.func @_conv3x3_bn_kernel(%arg0: i32, %arg1: i32, %arg2: memref<1x82x128xbf16, #tpu.memory_space<vmem>>, %arg3: memref<1152x128xbf16, #tpu.memory_space<vmem>>, %arg4: memref<1x128xf32, #tpu.memory_space<vmem>>, %arg5: memref<1x128xf32, #tpu.memory_space<vmem>>, %arg6: memref<1x64x128xf32, #tpu.memory_space<vmem>>, %arg7: memref<1x64x128xf32, #tpu.memory_space<vmem>>) attributes {dimension_semantics = [#tpu.dimension_semantics<parallel>, #tpu.dimension_semantics<parallel>], iteration_bounds = array<i64: 1, 2>, scalar_prefetch = 0 : i64, scratch_operands = 0 : i64, tpu.core_type = #tpu.core_type<tc>, window_params = [{transform_indices = @transform_0, window_bounds = array<i64: 1, 82, 128>}, {transform_indices = @transform_1, window_bounds = array<i64: 1152, 128>}, {transform_indices = @transform_2, window_bounds = array<i64: 1, 128>}, {transform_indices = @transform_3, window_bounds = array<i64: 1, 128>}, {transform_indices = @transform_4, window_bounds = array<i64: 1, 64, 128>}, {transform_indices = @transform_5, window_bounds = array<i64: 1, 64, 128>}]} {
    %0 = tpu.iota {dimensions = array<i32: 0>} : vector<64x1xi32>
    %c8_i32 = arith.constant 8 : i32
    %c0_i32 = arith.constant 0 : i32
    %1 = arith.cmpi eq, %c8_i32, %c0_i32 : i32
    %c1_i32 = arith.constant 1 : i32
    %2 = arith.select %1, %c1_i32, %c8_i32 : i32
    %3 = vector.broadcast %2 : i32 to vector<64x1xi32>
    %4 = arith.remsi %0, %3 : vector<64x1xi32>
    %c0_i32_0 = arith.constant 0 : i32
    %5 = vector.broadcast %c0_i32_0 : i32 to vector<64x1xi32>
    %6 = arith.cmpi ne, %4, %5 : vector<64x1xi32>
    %c0_i32_1 = arith.constant 0 : i32
    %7 = vector.broadcast %c0_i32_1 : i32 to vector<64x1xi32>
    %8 = arith.cmpi slt, %4, %7 : vector<64x1xi32>
    %c0_i32_2 = arith.constant 0 : i32
    %9 = arith.cmpi slt, %2, %c0_i32_2 : i32
    %10 = vector.broadcast %9 : i1 to vector<64x1xi1>
    %11 = vector.broadcast %10 : vector<64x1xi1> to vector<64x1xi1>
    %12 = arith.xori %8, %11 : vector<64x1xi1>
    %13 = arith.andi %12, %6 : vector<64x1xi1>
    %14 = vector.broadcast %2 : i32 to vector<64x1xi32>
    %15 = arith.addi %4, %14 : vector<64x1xi32>
    %16 = arith.select %13, %15, %4 : vector<64x1xi1>, vector<64x1xi32>
    %c0 = arith.constant 0 : index
    %c0_3 = arith.constant 0 : index
    %c0_4 = arith.constant 0 : index
    %17 = vector.load %arg2[%c0, %c0_3, %c0_4] : memref<1x82x128xbf16, #tpu.memory_space<vmem>>, vector<1x64x128xbf16>
    %18 = vector.shape_cast %17 : vector<1x64x128xbf16> to vector<64x128xbf16>
    %c-1_i32 = arith.constant -1 : i32
    %19 = vector.broadcast %c-1_i32 : i32 to vector<64x1xi32>
    %20 = arith.addi %16, %19 : vector<64x1xi32>
    %c0_i32_5 = arith.constant 0 : i32
    %21 = vector.broadcast %c0_i32_5 : i32 to vector<64x1xi32>
    %22 = arith.cmpi sge, %20, %21 : vector<64x1xi32>
    %c-1_i32_6 = arith.constant -1 : i32
    %23 = vector.broadcast %c-1_i32_6 : i32 to vector<64x1xi32>
    %24 = arith.addi %16, %23 : vector<64x1xi32>
    %c8_i32_7 = arith.constant 8 : i32
    %25 = vector.broadcast %c8_i32_7 : i32 to vector<64x1xi32>
    %26 = arith.cmpi slt, %24, %25 : vector<64x1xi32>
    %27 = arith.andi %22, %26 : vector<64x1xi1>
    %cst = arith.constant 0.000000e+00 : bf16
    %28 = vector.broadcast %cst : bf16 to vector<64x128xbf16>
    %29 = vector.shape_cast %27 : vector<64x1xi1> to vector<64x1xi1>
    %30 = vector.broadcast %29 : vector<64x1xi1> to vector<64x128xi1>
    %31 = arith.select %30, %18, %28 : vector<64x128xi1>, vector<64x128xbf16>
    %c0_8 = arith.constant 0 : index
    %c0_9 = arith.constant 0 : index
    %32 = vector.load %arg3[%c0_8, %c0_9] : memref<1152x128xbf16, #tpu.memory_space<vmem>>, vector<128x128xbf16>
    %cst_10 = arith.constant dense<0.000000e+00> : vector<64x128xf32>
    %33 = tpu.matmul %31, %32, %cst_10 {dimension_numbers = #tpu.dot_dimension_numbers<[1], [0], [0], [1], [0, 0, 1, 1], [], []>} : vector<64x128xbf16>, vector<128x128xbf16>, vector<64x128xf32> -> vector<64x128xf32>
    %c0_11 = arith.constant 0 : index
    %c1 = arith.constant 1 : index
    %c0_12 = arith.constant 0 : index
    %34 = vector.load %arg2[%c0_11, %c1, %c0_12] : memref<1x82x128xbf16, #tpu.memory_space<vmem>>, vector<1x64x128xbf16>
    %35 = vector.shape_cast %34 : vector<1x64x128xbf16> to vector<64x128xbf16>
    %c128 = arith.constant 128 : index
    %c0_13 = arith.constant 0 : index
    %36 = vector.load %arg3[%c128, %c0_13] : memref<1152x128xbf16, #tpu.memory_space<vmem>>, vector<128x128xbf16>
    %cst_14 = arith.constant dense<0.000000e+00> : vector<64x128xf32>
    %37 = tpu.matmul %35, %36, %cst_14 {dimension_numbers = #tpu.dot_dimension_numbers<[1], [0], [0], [1], [0, 0, 1, 1], [], []>} : vector<64x128xbf16>, vector<128x128xbf16>, vector<64x128xf32> -> vector<64x128xf32>
    %38 = arith.addf %33, %37 : vector<64x128xf32>
    %c0_15 = arith.constant 0 : index
    %c2 = arith.constant 2 : index
    %c0_16 = arith.constant 0 : index
    %39 = vector.load %arg2[%c0_15, %c2, %c0_16] : memref<1x82x128xbf16, #tpu.memory_space<vmem>>, vector<1x64x128xbf16>
    %40 = vector.shape_cast %39 : vector<1x64x128xbf16> to vector<64x128xbf16>
    %c1_i32_17 = arith.constant 1 : i32
    %41 = vector.broadcast %c1_i32_17 : i32 to vector<64x1xi32>
    %42 = arith.addi %16, %41 : vector<64x1xi32>
    %c0_i32_18 = arith.constant 0 : i32
    %43 = vector.broadcast %c0_i32_18 : i32 to vector<64x1xi32>
    %44 = arith.cmpi sge, %42, %43 : vector<64x1xi32>
    %c1_i32_19 = arith.constant 1 : i32
    %45 = vector.broadcast %c1_i32_19 : i32 to vector<64x1xi32>
    %46 = arith.addi %16, %45 : vector<64x1xi32>
    %c8_i32_20 = arith.constant 8 : i32
    %47 = vector.broadcast %c8_i32_20 : i32 to vector<64x1xi32>
    %48 = arith.cmpi slt, %46, %47 : vector<64x1xi32>
    %49 = arith.andi %44, %48 : vector<64x1xi1>
    %cst_21 = arith.constant 0.000000e+00 : bf16
    %50 = vector.broadcast %cst_21 : bf16 to vector<64x128xbf16>
    %51 = vector.shape_cast %49 : vector<64x1xi1> to vector<64x1xi1>
    %52 = vector.broadcast %51 : vector<64x1xi1> to vector<64x128xi1>
    %53 = arith.select %52, %40, %50 : vector<64x128xi1>, vector<64x128xbf16>
    %c256 = arith.constant 256 : index
    %c0_22 = arith.constant 0 : index
    %54 = vector.load %arg3[%c256, %c0_22] : memref<1152x128xbf16, #tpu.memory_space<vmem>>, vector<128x128xbf16>
    %cst_23 = arith.constant dense<0.000000e+00> : vector<64x128xf32>
    %55 = tpu.matmul %53, %54, %cst_23 {dimension_numbers = #tpu.dot_dimension_numbers<[1], [0], [0], [1], [0, 0, 1, 1], [], []>} : vector<64x128xbf16>, vector<128x128xbf16>, vector<64x128xf32> -> vector<64x128xf32>
    %56 = arith.addf %38, %55 : vector<64x128xf32>
    %c0_24 = arith.constant 0 : index
    %c8 = arith.constant 8 : index
    %c0_25 = arith.constant 0 : index
    %57 = vector.load %arg2[%c0_24, %c8, %c0_25] : memref<1x82x128xbf16, #tpu.memory_space<vmem>>, vector<1x64x128xbf16>
    %58 = vector.shape_cast %57 : vector<1x64x128xbf16> to vector<64x128xbf16>
    %c-1_i32_26 = arith.constant -1 : i32
    %59 = vector.broadcast %c-1_i32_26 : i32 to vector<64x1xi32>
    %60 = arith.addi %16, %59 : vector<64x1xi32>
    %c0_i32_27 = arith.constant 0 : i32
    %61 = vector.broadcast %c0_i32_27 : i32 to vector<64x1xi32>
    %62 = arith.cmpi sge, %60, %61 : vector<64x1xi32>
    %c-1_i32_28 = arith.constant -1 : i32
    %63 = vector.broadcast %c-1_i32_28 : i32 to vector<64x1xi32>
    %64 = arith.addi %16, %63 : vector<64x1xi32>
    %c8_i32_29 = arith.constant 8 : i32
    %65 = vector.broadcast %c8_i32_29 : i32 to vector<64x1xi32>
    %66 = arith.cmpi slt, %64, %65 : vector<64x1xi32>
    %67 = arith.andi %62, %66 : vector<64x1xi1>
    %cst_30 = arith.constant 0.000000e+00 : bf16
    %68 = vector.broadcast %cst_30 : bf16 to vector<64x128xbf16>
    %69 = vector.shape_cast %67 : vector<64x1xi1> to vector<64x1xi1>
    %70 = vector.broadcast %69 : vector<64x1xi1> to vector<64x128xi1>
    %71 = arith.select %70, %58, %68 : vector<64x128xi1>, vector<64x128xbf16>
    %c384 = arith.constant 384 : index
    %c0_31 = arith.constant 0 : index
    %72 = vector.load %arg3[%c384, %c0_31] : memref<1152x128xbf16, #tpu.memory_space<vmem>>, vector<128x128xbf16>
    %cst_32 = arith.constant dense<0.000000e+00> : vector<64x128xf32>
    %73 = tpu.matmul %71, %72, %cst_32 {dimension_numbers = #tpu.dot_dimension_numbers<[1], [0], [0], [1], [0, 0, 1, 1], [], []>} : vector<64x128xbf16>, vector<128x128xbf16>, vector<64x128xf32> -> vector<64x128xf32>
    %74 = arith.addf %56, %73 : vector<64x128xf32>
    %c0_33 = arith.constant 0 : index
    %c9 = arith.constant 9 : index
    %c0_34 = arith.constant 0 : index
    %75 = vector.load %arg2[%c0_33, %c9, %c0_34] : memref<1x82x128xbf16, #tpu.memory_space<vmem>>, vector<1x64x128xbf16>
    %76 = vector.shape_cast %75 : vector<1x64x128xbf16> to vector<64x128xbf16>
    %c512 = arith.constant 512 : index
    %c0_35 = arith.constant 0 : index
    %77 = vector.load %arg3[%c512, %c0_35] : memref<1152x128xbf16, #tpu.memory_space<vmem>>, vector<128x128xbf16>
    %cst_36 = arith.constant dense<0.000000e+00> : vector<64x128xf32>
    %78 = tpu.matmul %76, %77, %cst_36 {dimension_numbers = #tpu.dot_dimension_numbers<[1], [0], [0], [1], [0, 0, 1, 1], [], []>} : vector<64x128xbf16>, vector<128x128xbf16>, vector<64x128xf32> -> vector<64x128xf32>
    %79 = arith.addf %74, %78 : vector<64x128xf32>
    %c0_37 = arith.constant 0 : index
    %c10 = arith.constant 10 : index
    %c0_38 = arith.constant 0 : index
    %80 = vector.load %arg2[%c0_37, %c10, %c0_38] : memref<1x82x128xbf16, #tpu.memory_space<vmem>>, vector<1x64x128xbf16>
    %81 = vector.shape_cast %80 : vector<1x64x128xbf16> to vector<64x128xbf16>
    %c1_i32_39 = arith.constant 1 : i32
    %82 = vector.broadcast %c1_i32_39 : i32 to vector<64x1xi32>
    %83 = arith.addi %16, %82 : vector<64x1xi32>
    %c0_i32_40 = arith.constant 0 : i32
    %84 = vector.broadcast %c0_i32_40 : i32 to vector<64x1xi32>
    %85 = arith.cmpi sge, %83, %84 : vector<64x1xi32>
    %c1_i32_41 = arith.constant 1 : i32
    %86 = vector.broadcast %c1_i32_41 : i32 to vector<64x1xi32>
    %87 = arith.addi %16, %86 : vector<64x1xi32>
    %c8_i32_42 = arith.constant 8 : i32
    %88 = vector.broadcast %c8_i32_42 : i32 to vector<64x1xi32>
    %89 = arith.cmpi slt, %87, %88 : vector<64x1xi32>
    %90 = arith.andi %85, %89 : vector<64x1xi1>
    %cst_43 = arith.constant 0.000000e+00 : bf16
    %91 = vector.broadcast %cst_43 : bf16 to vector<64x128xbf16>
    %92 = vector.shape_cast %90 : vector<64x1xi1> to vector<64x1xi1>
    %93 = vector.broadcast %92 : vector<64x1xi1> to vector<64x128xi1>
    %94 = arith.select %93, %81, %91 : vector<64x128xi1>, vector<64x128xbf16>
    %c640 = arith.constant 640 : index
    %c0_44 = arith.constant 0 : index
    %95 = vector.load %arg3[%c640, %c0_44] : memref<1152x128xbf16, #tpu.memory_space<vmem>>, vector<128x128xbf16>
    %cst_45 = arith.constant dense<0.000000e+00> : vector<64x128xf32>
    %96 = tpu.matmul %94, %95, %cst_45 {dimension_numbers = #tpu.dot_dimension_numbers<[1], [0], [0], [1], [0, 0, 1, 1], [], []>} : vector<64x128xbf16>, vector<128x128xbf16>, vector<64x128xf32> -> vector<64x128xf32>
    %97 = arith.addf %79, %96 : vector<64x128xf32>
    %c0_46 = arith.constant 0 : index
    %c16 = arith.constant 16 : index
    %c0_47 = arith.constant 0 : index
    %98 = vector.load %arg2[%c0_46, %c16, %c0_47] : memref<1x82x128xbf16, #tpu.memory_space<vmem>>, vector<1x64x128xbf16>
    %99 = vector.shape_cast %98 : vector<1x64x128xbf16> to vector<64x128xbf16>
    %c-1_i32_48 = arith.constant -1 : i32
    %100 = vector.broadcast %c-1_i32_48 : i32 to vector<64x1xi32>
    %101 = arith.addi %16, %100 : vector<64x1xi32>
    %c0_i32_49 = arith.constant 0 : i32
    %102 = vector.broadcast %c0_i32_49 : i32 to vector<64x1xi32>
    %103 = arith.cmpi sge, %101, %102 : vector<64x1xi32>
    %c-1_i32_50 = arith.constant -1 : i32
    %104 = vector.broadcast %c-1_i32_50 : i32 to vector<64x1xi32>
    %105 = arith.addi %16, %104 : vector<64x1xi32>
    %c8_i32_51 = arith.constant 8 : i32
    %106 = vector.broadcast %c8_i32_51 : i32 to vector<64x1xi32>
    %107 = arith.cmpi slt, %105, %106 : vector<64x1xi32>
    %108 = arith.andi %103, %107 : vector<64x1xi1>
    %cst_52 = arith.constant 0.000000e+00 : bf16
    %109 = vector.broadcast %cst_52 : bf16 to vector<64x128xbf16>
    %110 = vector.shape_cast %108 : vector<64x1xi1> to vector<64x1xi1>
    %111 = vector.broadcast %110 : vector<64x1xi1> to vector<64x128xi1>
    %112 = arith.select %111, %99, %109 : vector<64x128xi1>, vector<64x128xbf16>
    %c768 = arith.constant 768 : index
    %c0_53 = arith.constant 0 : index
    %113 = vector.load %arg3[%c768, %c0_53] : memref<1152x128xbf16, #tpu.memory_space<vmem>>, vector<128x128xbf16>
    %cst_54 = arith.constant dense<0.000000e+00> : vector<64x128xf32>
    %114 = tpu.matmul %112, %113, %cst_54 {dimension_numbers = #tpu.dot_dimension_numbers<[1], [0], [0], [1], [0, 0, 1, 1], [], []>} : vector<64x128xbf16>, vector<128x128xbf16>, vector<64x128xf32> -> vector<64x128xf32>
    %115 = arith.addf %97, %114 : vector<64x128xf32>
    %c0_55 = arith.constant 0 : index
    %c17 = arith.constant 17 : index
    %c0_56 = arith.constant 0 : index
    %116 = vector.load %arg2[%c0_55, %c17, %c0_56] : memref<1x82x128xbf16, #tpu.memory_space<vmem>>, vector<1x64x128xbf16>
    %117 = vector.shape_cast %116 : vector<1x64x128xbf16> to vector<64x128xbf16>
    %c896 = arith.constant 896 : index
    %c0_57 = arith.constant 0 : index
    %118 = vector.load %arg3[%c896, %c0_57] : memref<1152x128xbf16, #tpu.memory_space<vmem>>, vector<128x128xbf16>
    %cst_58 = arith.constant dense<0.000000e+00> : vector<64x128xf32>
    %119 = tpu.matmul %117, %118, %cst_58 {dimension_numbers = #tpu.dot_dimension_numbers<[1], [0], [0], [1], [0, 0, 1, 1], [], []>} : vector<64x128xbf16>, vector<128x128xbf16>, vector<64x128xf32> -> vector<64x128xf32>
    %120 = arith.addf %115, %119 : vector<64x128xf32>
    %c0_59 = arith.constant 0 : index
    %c18 = arith.constant 18 : index
    %c0_60 = arith.constant 0 : index
    %121 = vector.load %arg2[%c0_59, %c18, %c0_60] : memref<1x82x128xbf16, #tpu.memory_space<vmem>>, vector<1x64x128xbf16>
    %122 = vector.shape_cast %121 : vector<1x64x128xbf16> to vector<64x128xbf16>
    %c1_i32_61 = arith.constant 1 : i32
    %123 = vector.broadcast %c1_i32_61 : i32 to vector<64x1xi32>
    %124 = arith.addi %16, %123 : vector<64x1xi32>
    %c0_i32_62 = arith.constant 0 : i32
    %125 = vector.broadcast %c0_i32_62 : i32 to vector<64x1xi32>
    %126 = arith.cmpi sge, %124, %125 : vector<64x1xi32>
    %c1_i32_63 = arith.constant 1 : i32
    %127 = vector.broadcast %c1_i32_63 : i32 to vector<64x1xi32>
    %128 = arith.addi %16, %127 : vector<64x1xi32>
    %c8_i32_64 = arith.constant 8 : i32
    %129 = vector.broadcast %c8_i32_64 : i32 to vector<64x1xi32>
    %130 = arith.cmpi slt, %128, %129 : vector<64x1xi32>
    %131 = arith.andi %126, %130 : vector<64x1xi1>
    %cst_65 = arith.constant 0.000000e+00 : bf16
    %132 = vector.broadcast %cst_65 : bf16 to vector<64x128xbf16>
    %133 = vector.shape_cast %131 : vector<64x1xi1> to vector<64x1xi1>
    %134 = vector.broadcast %133 : vector<64x1xi1> to vector<64x128xi1>
    %135 = arith.select %134, %122, %132 : vector<64x128xi1>, vector<64x128xbf16>
    %c1024 = arith.constant 1024 : index
    %c0_66 = arith.constant 0 : index
    %136 = vector.load %arg3[%c1024, %c0_66] : memref<1152x128xbf16, #tpu.memory_space<vmem>>, vector<128x128xbf16>
    %cst_67 = arith.constant dense<0.000000e+00> : vector<64x128xf32>
    %137 = tpu.matmul %135, %136, %cst_67 {dimension_numbers = #tpu.dot_dimension_numbers<[1], [0], [0], [1], [0, 0, 1, 1], [], []>} : vector<64x128xbf16>, vector<128x128xbf16>, vector<64x128xf32> -> vector<64x128xf32>
    %138 = arith.addf %120, %137 : vector<64x128xf32>
    %c0_68 = arith.constant 0 : index
    %c0_69 = arith.constant 0 : index
    %139 = vector.load %arg4[%c0_68, %c0_69] : memref<1x128xf32, #tpu.memory_space<vmem>>, vector<1x128xf32>
    %140 = vector.broadcast %139 : vector<1x128xf32> to vector<64x128xf32>
    %141 = arith.mulf %138, %140 : vector<64x128xf32>
    %c0_70 = arith.constant 0 : index
    %c0_71 = arith.constant 0 : index
    %142 = vector.load %arg5[%c0_70, %c0_71] : memref<1x128xf32, #tpu.memory_space<vmem>>, vector<1x128xf32>
    %143 = vector.broadcast %142 : vector<1x128xf32> to vector<64x128xf32>
    %144 = arith.addf %141, %143 : vector<64x128xf32>
    %c0_72 = arith.constant 0 : index
    %c0_73 = arith.constant 0 : index
    %c0_74 = arith.constant 0 : index
    %145 = vector.load %arg6[%c0_72, %c0_73, %c0_74] : memref<1x64x128xf32, #tpu.memory_space<vmem>>, vector<1x64x128xf32>
    %146 = vector.shape_cast %145 : vector<1x64x128xf32> to vector<64x128xf32>
    %147 = arith.addf %144, %146 : vector<64x128xf32>
    %cst_75 = arith.constant 0.000000e+00 : f32
    %148 = vector.broadcast %cst_75 : f32 to vector<64x128xf32>
    %149 = arith.maximumf %147, %148 : vector<64x128xf32>
    %c0_76 = arith.constant 0 : index
    %c0_77 = arith.constant 0 : index
    %c0_78 = arith.constant 0 : index
    %150 = vector.load %arg7[%c0_76, %c0_77, %c0_78] : memref<1x64x128xf32, #tpu.memory_space<vmem>>, vector<1x64x128xf32>
    %151 = vector.shape_cast %150 : vector<1x64x128xf32> to vector<64x128xf32>
    %152 = vector.shape_cast %149 : vector<64x128xf32> to vector<1x64x128xf32>
    tpu.vector_store %arg7[%c0_76, %c0_77, %c0_78], %152 {strides = array<i32>} : memref<1x64x128xf32, #tpu.memory_space<vmem>>, vector<1x64x128xf32>,
    return
  }
  func.func @transform_0(%arg0: i32, %arg1: i32) -> (i32, i32, i32) {
    %c0_i32 = arith.constant 0 : i32
    %c0_i32_0 = arith.constant 0 : i32
    %c0_i32_1 = arith.constant 0 : i32
    return %arg1, %c0_i32, %c0_i32_0 : i32, i32, i32
  }
  func.func @transform_1(%arg0: i32, %arg1: i32) -> (i32, i32) {
    %c0_i32 = arith.constant 0 : i32
    %c0_i32_0 = arith.constant 0 : i32
    return %c0_i32, %arg0 : i32, i32
  }
  func.func @transform_2(%arg0: i32, %arg1: i32) -> (i32, i32) {
    %c0_i32 = arith.constant 0 : i32
    %c0_i32_0 = arith.constant 0 : i32
    return %c0_i32, %arg0 : i32, i32
  }
  func.func @transform_3(%arg0: i32, %arg1: i32) -> (i32, i32) {
    %c0_i32 = arith.constant 0 : i32
    %c0_i32_0 = arith.constant 0 : i32
    return %c0_i32, %arg0 : i32, i32
  }
  func.func @transform_4(%arg0: i32, %arg1: i32) -> (i32, i32, i32) {
    %c0_i32 = arith.constant 0 : i32
    %c0_i32_0 = arith.constant 0 : i32
    return %arg1, %c0_i32, %arg0 : i32, i32, i32
  }
  func.func @transform_5(%arg0: i32, %arg1: i32) -> (i32, i32, i32) {
    %c0_i32 = arith.constant 0 : i32
    %c0_i32_0 = arith.constant 0 : i32
    return %arg1, %c0_i32, %arg0 : i32, i32, i32
  }
}

</mosaic_0001>

<llo_original>
// kernel: basic_block_forward.3
$region0: #{basic_block_forward.3}
  #allocation0 [shape = 'u32[]', space=smem, size = 0x4, offset = 0x4, fixed_abs, tag = 'smem constant byte address 0x4 - core index']
  #allocation1 [shape = 'u32[72,128]{1,0:T(1,128)}', space=vmem, size = 0x9000, scoped, tag = 'internal scratch']
  %s0 = inlined_call_operand.vmem [shape: bf16[128,128], index: 0, kind: input, shape index: {}]
  %s1 = inlined_call_operand.vmem [shape: bf16[128,128], index: 1, kind: input, shape index: {}]
  %s2 = inlined_call_operand.vmem [shape: f32[1,128], index: 2, kind: input, shape index: {}]
  %s3 = inlined_call_operand.vmem [shape: f32[1,128], index: 3, kind: input, shape index: {}]
  %s4 = inlined_call_operand.vmem [shape: bf16[128,128], index: 4, kind: output, shape index: {}]
  %s5 = sld [smem:[#allocation0]]
  $region26: #{basic_block_forward.3} parent=0
    _
  %s7 = ssub.s32 1, %s5
  %s8 = scalar_select 0, %s7, %s5
  // Predicated region
  $region2: #{basic_block_forward.3} parent=0 // pred_check
    _
  $region3: #{basic_block_forward.3} parent=0 // pred_check_branch
    %10 = sbr.rel (0) target = $region5
  $region4: #{basic_block_forward.3} parent=0 // pred_region
    _
  $region5: #{basic_block_forward.3} parent=0 // pred_fallthru
    _
  // Predicated region
  $region6: #{basic_block_forward.3} parent=0 // pred_check
    _
  $region7: #{basic_block_forward.3} parent=0 // pred_check_branch
    %12 = sbr.rel (0) target = $region9
  $region8: #{basic_block_forward.3} parent=0 // pred_region
    _
  $region9: #{basic_block_forward.3} parent=0 // pred_fallthru
    _
  // Predicated region
  $region10: #{basic_block_forward.3} parent=0 // pred_check
    _
  $region11: #{basic_block_forward.3} parent=0 // pred_check_branch
    %14 = sbr.rel (0) target = $region13
  $region12: #{basic_block_forward.3} parent=0 // pred_region
    _
  $region13: #{basic_block_forward.3} parent=0 // pred_fallthru
    _
  // Predicated region
  $region14: #{basic_block_forward.3} parent=0 // pred_check
    _
  $region15: #{basic_block_forward.3} parent=0 // pred_check_branch
    %16 = sbr.rel (0) target = $region17
  $region16: #{basic_block_forward.3} parent=0 // pred_region
    _
  $region17: #{basic_block_forward.3} parent=0 // pred_fallthru
    _
  %v17 = vld [vmem:[%s0] sm:$0xf]
  %v18 = vld [vmem:[%s0 + $0x4] sm:$0xf]
  %v19 = vld [vmem:[%s0 + $0x8] sm:$0xf]
  %v20 = vld [vmem:[%s0 + $0xc] sm:$0xf]
  %v21 = vld [vmem:[%s0 + $0x10] sm:$0xf]
  %v22 = vld [vmem:[%s0 + $0x14] sm:$0xf]
  %v23 = vld [vmem:[%s0 + $0x18] sm:$0xf]
  %v24 = vld [vmem:[%s0 + $0x1c] sm:$0xf]
  %v25 = vld [vmem:[%s0 + $0x20] sm:$0xf]
  %v26 = vld [vmem:[%s0 + $0x24] sm:$0xf]
  %v27 = vld [vmem:[%s0 + $0x28] sm:$0xf]
  %v28 = vld [vmem:[%s0 + $0x2c] sm:$0xf]
  %v29 = vld [vmem:[%s0 + $0x30] sm:$0xf]
  %v30 = vld [vmem:[%s0 + $0x34] sm:$0xf]
  %v31 = vld [vmem:[%s0 + $0x38] sm:$0xf]
  %v32 = vld [vmem:[%s0 + $0x3c] sm:$0xf]
  %v33 = vld [vmem:[%s1] sm:$0xf]
  %v34 = vld [vmem:[%s1 + $0x4] sm:$0xf]
  %v35 = vld [vmem:[%s1 + $0x8] sm:$0xf]
  %v36 = vld [vmem:[%s1 + $0xc] sm:$0xf]
  %v37 = vld [vmem:[%s1 + $0x10] sm:$0xf]
  %v38 = vld [vmem:[%s1 + $0x14] sm:$0xf]
  %v39 = vld [vmem:[%s1 + $0x18] sm:$0xf]
  %v40 = vld [vmem:[%s1 + $0x1c] sm:$0xf]
  %v41 = vld [vmem:[%s1 + $0x20] sm:$0xf]
  %v42 = vld [vmem:[%s1 + $0x24] sm:$0xf]
  %v43 = vld [vmem:[%s1 + $0x28] sm:$0xf]
  %v44 = vld [vmem:[%s1 + $0x2c] sm:$0xf]
  %v45 = vld [vmem:[%s1 + $0x30] sm:$0xf]
  %v46 = vld [vmem:[%s1 + $0x34] sm:$0xf]
  %v47 = vld [vmem:[%s1 + $0x38] sm:$0xf]
  %v48 = vld [vmem:[%s1 + $0x3c] sm:$0xf]
  %v65 = vunpack.c.l.b16 %v17
  %v66 = vunpack.c.l.b16 %v18
  %v67 = vunpack.c.l.b16 %v19
  %v68 = vunpack.c.l.b16 %v20
  %v69 = vunpack.c.l.b16 %v21
  %v70 = vunpack.c.l.b16 %v22
  %v71 = vunpack.c.l.b16 %v23
  %v72 = vunpack.c.l.b16 %v24
  %v73 = vunpack.c.l.b16 %v25
  %v74 = vunpack.c.l.b16 %v26
  %v75 = vunpack.c.l.b16 %v27
  %v76 = vunpack.c.l.b16 %v28
  %v77 = vunpack.c.l.b16 %v29
  %v78 = vunpack.c.l.b16 %v30
  %v79 = vunpack.c.l.b16 %v31
  %v80 = vunpack.c.l.b16 %v32
  %v81 = vpack.c.b16 %v66, %v65
  %v82 = vpack.c.b16 %v68, %v67
  %v83 = vpack.c.b16 %v70, %v69
  %v84 = vpack.c.b16 %v72, %v71
  %v85 = vpack.c.b16 %v74, %v73
  %v86 = vpack.c.b16 %v76, %v75
  %v87 = vpack.c.b16 %v78, %v77
  %v88 = vpack.c.b16 %v80, %v79
  %v113 = vunpack.c.l.b16 %v33
  %v114 = vunpack.c.l.b16 %v34
  %v115 = vunpack.c.l.b16 %v35
  %v116 = vunpack.c.l.b16 %v36
  %v117 = vunpack.c.l.b16 %v37
  %v118 = vunpack.c.l.b16 %v38
  %v119 = vunpack.c.l.b16 %v39
  %v120 = vunpack.c.l.b16 %v40
  %v121 = vunpack.c.l.b16 %v41
  %v122 = vunpack.c.l.b16 %v42
  %v123 = vunpack.c.l.b16 %v43
  %v124 = vunpack.c.l.b16 %v44
  %v125 = vunpack.c.l.b16 %v45
  %v126 = vunpack.c.l.b16 %v46
  %v127 = vunpack.c.l.b16 %v47
  %v128 = vunpack.c.l.b16 %v48
  %v129 = vpack.c.b16 %v114, %v113
  %v130 = vpack.c.b16 %v116, %v115
  %v131 = vpack.c.b16 %v118, %v117
  %v132 = vpack.c.b16 %v120, %v119
  %v133 = vpack.c.b16 %v122, %v121
  %v134 = vpack.c.b16 %v124, %v123
  %v135 = vpack.c.b16 %v126, %v125
  %v136 = vpack.c.b16 %v128, %v127
  %145 = vmatpush.bf16.msra.mxu0 %v136
  %146 = vmatpush.bf16.msra.mxu0 %v135
  %147 = vmatpush.bf16.msra.mxu0 %v134
  %148 = vmatpush.bf16.msra.mxu0 %v133
  %149 = vmatpush.bf16.msra.mxu0 %v132
  %150 = vmatpush.bf16.msra.mxu0 %v131
  %151 = vmatpush.bf16.msra.mxu0 %v130
  %152 = vmatpush.bf16.msra.mxu0 %v129
  %153 = vmatmul.bf16.gmra.mxu0 %v81
  %v154 = vpop.f32.mrf.mxu0
  %v155 = vadd.f32 0.0, %v154
  %v156 = vpop.f32.mrf.mxu0
  %v157 = vadd.f32 0.0, %v156
  %158 = vmatmul.bf16.gmra.mxu0 %v82
  %v159 = vpop.f32.mrf.mxu0
  %v160 = vadd.f32 0.0, %v159
  %v161 = vpop.f32.mrf.mxu0
  %v162 = vadd.f32 0.0, %v161
  %163 = vmatmul.bf16.gmra.mxu0 %v83
  %v164 = vpop.f32.mrf.mxu0
  %v165 = vadd.f32 0.0, %v164
  %v166 = vpop.f32.mrf.mxu0
  %v167 = vadd.f32 0.0, %v166
  %168 = vmatmul.bf16.gmra.mxu0 %v84
  %v169 = vpop.f32.mrf.mxu0
  %v170 = vadd.f32 0.0, %v169
  %v171 = vpop.f32.mrf.mxu0
  %v172 = vadd.f32 0.0, %v171
  %173 = vmatmul.bf16.gmra.mxu0 %v85
  %v174 = vpop.f32.mrf.mxu0
  %v175 = vadd.f32 0.0, %v174
  %v176 = vpop.f32.mrf.mxu0
  %v177 = vadd.f32 0.0, %v176
  %178 = vmatmul.bf16.gmra.mxu0 %v86
  %v179 = vpop.f32.mrf.mxu0
  %v180 = vadd.f32 0.0, %v179
  %v181 = vpop.f32.mrf.mxu0
  %v182 = vadd.f32 0.0, %v181
  %183 = vmatmul.bf16.gmra.mxu0 %v87
  %v184 = vpop.f32.mrf.mxu0
  %v185 = vadd.f32 0.0, %v184
  %v186 = vpop.f32.mrf.mxu0
  %v187 = vadd.f32 0.0, %v186
  %188 = vmatmul.bf16.gmra.mxu0 %v88
  %v189 = vpop.f32.mrf.mxu0
  %v190 = vadd.f32 0.0, %v189
  %v191 = vpop.f32.mrf.mxu0
  %v192 = vadd.f32 0.0, %v191
  %193 = vdwg.mxu0
  %v194 = vld [vmem:[%s2] sm:$0x1]
  %v196 = vperm.slane %v194, 0
  %v198 = vmul.f32 %v155, %v196
  %v199 = vmul.f32 %v157, %v196
  %v200 = vmul.f32 %v160, %v196
  %v201 = vmul.f32 %v162, %v196
  %v202 = vmul.f32 %v165, %v196
  %v203 = vmul.f32 %v167, %v196
  %v204 = vmul.f32 %v170, %v196
  %v205 = vmul.f32 %v172, %v196
  %v206 = vmul.f32 %v175, %v196
  %v207 = vmul.f32 %v177, %v196
  %v208 = vmul.f32 %v180, %v196
  %v209 = vmul.f32 %v182, %v196
  %v210 = vmul.f32 %v185, %v196
  %v211 = vmul.f32 %v187, %v196
  %v212 = vmul.f32 %v190, %v196
  %v213 = vmul.f32 %v192, %v196
  %v214 = vld [vmem:[%s3] sm:$0x1]
  %v216 = vperm.slane %v214, 0
  %v218 = vadd.f32 %v198, %v216
  %v219 = vadd.f32 %v199, %v216
  %v220 = vadd.f32 %v200, %v216
  %v221 = vadd.f32 %v201, %v216
  %v222 = vadd.f32 %v202, %v216
  %v223 = vadd.f32 %v203, %v216
  %v224 = vadd.f32 %v204, %v216
  %v225 = vadd.f32 %v205, %v216
  %v226 = vadd.f32 %v206, %v216
  %v227 = vadd.f32 %v207, %v216
  %v228 = vadd.f32 %v208, %v216
  %v229 = vadd.f32 %v209, %v216
  %v230 = vadd.f32 %v210, %v216
  %v231 = vadd.f32 %v211, %v216
  %v232 = vadd.f32 %v212, %v216
  %v233 = vadd.f32 %v213, %v216
  %v234 = vmax.f32 %v218, 0.0
  %v235 = vmax.f32 %v219, 0.0
  %v236 = vmax.f32 %v220, 0.0
  %v237 = vmax.f32 %v221, 0.0
  %v238 = vmax.f32 %v222, 0.0
  %v239 = vmax.f32 %v223, 0.0
  %v240 = vmax.f32 %v224, 0.0
  %v241 = vmax.f32 %v225, 0.0
  %v242 = vmax.f32 %v226, 0.0
  %v243 = vmax.f32 %v227, 0.0
  %v244 = vmax.f32 %v228, 0.0
  %v245 = vmax.f32 %v229, 0.0
  %v246 = vmax.f32 %v230, 0.0
  %v247 = vmax.f32 %v231, 0.0
  %v248 = vmax.f32 %v232, 0.0
  %v249 = vmax.f32 %v233, 0.0
  %v250 = vpack.c.bf16 %v234, %v234
  %v251 = vpack.c.bf16 %v235, %v235
  %v252 = vpack.c.bf16 %v236, %v236
  %v253 = vpack.c.bf16 %v237, %v237
  %v254 = vpack.c.bf16 %v238, %v238
  %v255 = vpack.c.bf16 %v239, %v239
  %v256 = vpack.c.bf16 %v240, %v240
  %v257 = vpack.c.bf16 %v241, %v241
  %v258 = vpack.c.bf16 %v242, %v242
  %v259 = vpack.c.bf16 %v243, %v243
  %v260 = vpack.c.bf16 %v244, %v244
  %v261 = vpack.c.bf16 %v245, %v245
  %v262 = vpack.c.bf16 %v246, %v246
  %v263 = vpack.c.bf16 %v247, %v247
  %v264 = vpack.c.bf16 %v248, %v248
  %v265 = vpack.c.bf16 %v249, %v249
  %266 = vst [vmem:[%s4] sm:$0xf] %v250
  %267 = vst [vmem:[%s4 + $0x4] sm:$0xf] %v251
  %268 = vst [vmem:[%s4 + $0x8] sm:$0xf] %v252
  %269 = vst [vmem:[%s4 + $0xc] sm:$0xf] %v253
  %270 = vst [vmem:[%s4 + $0x10] sm:$0xf] %v254
  %271 = vst [vmem:[%s4 + $0x14] sm:$0xf] %v255
  %272 = vst [vmem:[%s4 + $0x18] sm:$0xf] %v256
  %273 = vst [vmem:[%s4 + $0x1c] sm:$0xf] %v257
  %274 = vst [vmem:[%s4 + $0x20] sm:$0xf] %v258
  %275 = vst [vmem:[%s4 + $0x24] sm:$0xf] %v259
  %276 = vst [vmem:[%s4 + $0x28] sm:$0xf] %v260
  %277 = vst [vmem:[%s4 + $0x2c] sm:$0xf] %v261
  %278 = vst [vmem:[%s4 + $0x30] sm:$0xf] %v262
  %279 = vst [vmem:[%s4 + $0x34] sm:$0xf] %v263
  %280 = vst [vmem:[%s4 + $0x38] sm:$0xf] %v264
  %281 = vst [vmem:[%s4 + $0x3c] sm:$0xf] %v265
  // Predicated region
  $region18: #{basic_block_forward.3} parent=0 // pred_check
    _
  $region19: #{basic_block_forward.3} parent=0 // pred_check_branch
    %283 = sbr.rel (0) target = $region21
  $region20: #{basic_block_forward.3} parent=0 // pred_region
    _
  $region21: #{basic_block_forward.3} parent=0 // pred_fallthru
    _
  // Predicated region
  $region22: #{basic_block_forward.3} parent=0 // pred_check
    _
  $region23: #{basic_block_forward.3} parent=0 // pred_check_branch
    %285 = sbr.rel (0) target = $region25
  $region24: #{basic_block_forward.3} parent=0 // pred_region
    _
  $region25: #{basic_block_forward.3} parent=0 // pred_fallthru
    _

// kernel: basic_block_forward.4
$region0: #{basic_block_forward.4}
  #allocation0 [shape = 'u32[]', space=smem, size = 0x4, offset = 0x4, fixed_abs, tag = 'smem constant byte address 0x4 - core index']
  #allocation1 [shape = 'u32[72,128]{1,0:T(1,128)}', space=vmem, size = 0x9000, scoped, tag = 'internal scratch']
  %s0 = inlined_call_operand.vmem [shape: bf16[128,128], index: 0, kind: input, shape index: {}]
  %s1 = inlined_call_operand.vmem [shape: bf16[128,128], index: 1, kind: input, shape index: {}]
  %s2 = inlined_call_operand.vmem [shape: f32[1,128], index: 2, kind: input, shape index: {}]
  %s3 = inlined_call_operand.vmem [shape: f32[1,128], index: 3, kind: input, shape index: {}]
  %s4 = inlined_call_operand.vmem [shape: f32[128,128], index: 4, kind: output, shape index: {}]
  %s5 = sld [smem:[#allocation0]]
  $region26: #{basic_block_forward.4} parent=0
    _
  %s7 = ssub.s32 1, %s5
  %s8 = scalar_select 0, %s7, %s5
  // Predicated region
  $region2: #{basic_block_forward.4} parent=0 // pred_check
    _
  $region3: #{basic_block_forward.4} parent=0 // pred_check_branch
    %10 = sbr.rel (0) target = $region5
  $region4: #{basic_block_forward.4} parent=0 // pred_region
    _
  $region5: #{basic_block_forward.4} parent=0 // pred_fallthru
    _
  // Predicated region
  $region6: #{basic_block_forward.4} parent=0 // pred_check
    _
  $region7: #{basic_block_forward.4} parent=0 // pred_check_branch
    %12 = sbr.rel (0) target = $region9
  $region8: #{basic_block_forward.4} parent=0 // pred_region
    _
  $region9: #{basic_block_forward.4} parent=0 // pred_fallthru
    _
  // Predicated region
  $region10: #{basic_block_forward.4} parent=0 // pred_check
    _
  $region11: #{basic_block_forward.4} parent=0 // pred_check_branch
    %14 = sbr.rel (0) target = $region13
  $region12: #{basic_block_forward.4} parent=0 // pred_region
    _
  $region13: #{basic_block_forward.4} parent=0 // pred_fallthru
    _
  // Predicated region
  $region14: #{basic_block_forward.4} parent=0 // pred_check
    _
  $region15: #{basic_block_forward.4} parent=0 // pred_check_branch
    %16 = sbr.rel (0) target = $region17
  $region16: #{basic_block_forward.4} parent=0 // pred_region
    _
  $region17: #{basic_block_forward.4} parent=0 // pred_fallthru
    _
  %v17 = vld [vmem:[%s0] sm:$0xf]
  %v18 = vld [vmem:[%s0 + $0x4] sm:$0xf]
  %v19 = vld [vmem:[%s0 + $0x8] sm:$0xf]
  %v20 = vld [vmem:[%s0 + $0xc] sm:$0xf]
  %v21 = vld [vmem:[%s0 + $0x10] sm:$0xf]
  %v22 = vld [vmem:[%s0 + $0x14] sm:$0xf]
  %v23 = vld [vmem:[%s0 + $0x18] sm:$0xf]
  %v24 = vld [vmem:[%s0 + $0x1c] sm:$0xf]
  %v25 = vld [vmem:[%s0 + $0x20] sm:$0xf]
  %v26 = vld [vmem:[%s0 + $0x24] sm:$0xf]
  %v27 = vld [vmem:[%s0 + $0x28] sm:$0xf]
  %v28 = vld [vmem:[%s0 + $0x2c] sm:$0xf]
  %v29 = vld [vmem:[%s0 + $0x30] sm:$0xf]
  %v30 = vld [vmem:[%s0 + $0x34] sm:$0xf]
  %v31 = vld [vmem:[%s0 + $0x38] sm:$0xf]
  %v32 = vld [vmem:[%s0 + $0x3c] sm:$0xf]
  %v33 = vld [vmem:[%s1] sm:$0xf]
  %v34 = vld [vmem:[%s1 + $0x4] sm:$0xf]
  %v35 = vld [vmem:[%s1 + $0x8] sm:$0xf]
  %v36 = vld [vmem:[%s1 + $0xc] sm:$0xf]
  %v37 = vld [vmem:[%s1 + $0x10] sm:$0xf]
  %v38 = vld [vmem:[%s1 + $0x14] sm:$0xf]
  %v39 = vld [vmem:[%s1 + $0x18] sm:$0xf]
  %v40 = vld [vmem:[%s1 + $0x1c] sm:$0xf]
  %v41 = vld [vmem:[%s1 + $0x20] sm:$0xf]
  %v42 = vld [vmem:[%s1 + $0x24] sm:$0xf]
  %v43 = vld [vmem:[%s1 + $0x28] sm:$0xf]
  %v44 = vld [vmem:[%s1 + $0x2c] sm:$0xf]
  %v45 = vld [vmem:[%s1 + $0x30] sm:$0xf]
  %v46 = vld [vmem:[%s1 + $0x34] sm:$0xf]
  %v47 = vld [vmem:[%s1 + $0x38] sm:$0xf]
  %v48 = vld [vmem:[%s1 + $0x3c] sm:$0xf]
  %v65 = vunpack.c.l.b16 %v17
  %v66 = vunpack.c.l.b16 %v18
  %v67 = vunpack.c.l.b16 %v19
  %v68 = vunpack.c.l.b16 %v20
  %v69 = vunpack.c.l.b16 %v21
  %v70 = vunpack.c.l.b16 %v22
  %v71 = vunpack.c.l.b16 %v23
  %v72 = vunpack.c.l.b16 %v24
  %v73 = vunpack.c.l.b16 %v25
  %v74 = vunpack.c.l.b16 %v26
  %v75 = vunpack.c.l.b16 %v27
  %v76 = vunpack.c.l.b16 %v28
  %v77 = vunpack.c.l.b16 %v29
  %v78 = vunpack.c.l.b16 %v30
  %v79 = vunpack.c.l.b16 %v31
  %v80 = vunpack.c.l.b16 %v32
  %v81 = vpack.c.b16 %v66, %v65
  %v82 = vpack.c.b16 %v68, %v67
  %v83 = vpack.c.b16 %v70, %v69
  %v84 = vpack.c.b16 %v72, %v71
  %v85 = vpack.c.b16 %v74, %v73
  %v86 = vpack.c.b16 %v76, %v75
  %v87 = vpack.c.b16 %v78, %v77
  %v88 = vpack.c.b16 %v80, %v79
  %v113 = vunpack.c.l.b16 %v33
  %v114 = vunpack.c.l.b16 %v34
  %v115 = vunpack.c.l.b16 %v35
  %v116 = vunpack.c.l.b16 %v36
  %v117 = vunpack.c.l.b16 %v37
  %v118 = vunpack.c.l.b16 %v38
  %v119 = vunpack.c.l.b16 %v39
  %v120 = vunpack.c.l.b16 %v40
  %v121 = vunpack.c.l.b16 %v41
  %v122 = vunpack.c.l.b16 %v42
  %v123 = vunpack.c.l.b16 %v43
  %v124 = vunpack.c.l.b16 %v44
  %v125 = vunpack.c.l.b16 %v45
  %v126 = vunpack.c.l.b16 %v46
  %v127 = vunpack.c.l.b16 %v47
  %v128 = vunpack.c.l.b16 %v48
  %v129 = vpack.c.b16 %v114, %v113
  %v130 = vpack.c.b16 %v116, %v115
  %v131 = vpack.c.b16 %v118, %v117
  %v132 = vpack.c.b16 %v120, %v119
  %v133 = vpack.c.b16 %v122, %v121
  %v134 = vpack.c.b16 %v124, %v123
  %v135 = vpack.c.b16 %v126, %v125
  %v136 = vpack.c.b16 %v128, %v127
  %145 = vmatpush.bf16.msra.mxu0 %v136
  %146 = vmatpush.bf16.msra.mxu0 %v135
  %147 = vmatpush.bf16.msra.mxu0 %v134
  %148 = vmatpush.bf16.msra.mxu0 %v133
  %149 = vmatpush.bf16.msra.mxu0 %v132
  %150 = vmatpush.bf16.msra.mxu0 %v131
  %151 = vmatpush.bf16.msra.mxu0 %v130
  %152 = vmatpush.bf16.msra.mxu0 %v129
  %153 = vmatmul.bf16.gmra.mxu0 %v81
  %v154 = vpop.f32.mrf.mxu0
  %v155 = vadd.f32 0.0, %v154
  %v156 = vpop.f32.mrf.mxu0
  %v157 = vadd.f32 0.0, %v156
  %158 = vmatmul.bf16.gmra.mxu0 %v82
  %v159 = vpop.f32.mrf.mxu0
  %v160 = vadd.f32 0.0, %v159
  %v161 = vpop.f32.mrf.mxu0
  %v162 = vadd.f32 0.0, %v161
  %163 = vmatmul.bf16.gmra.mxu0 %v83
  %v164 = vpop.f32.mrf.mxu0
  %v165 = vadd.f32 0.0, %v164
  %v166 = vpop.f32.mrf.mxu0
  %v167 = vadd.f32 0.0, %v166
  %168 = vmatmul.bf16.gmra.mxu0 %v84
  %v169 = vpop.f32.mrf.mxu0
  %v170 = vadd.f32 0.0, %v169
  %v171 = vpop.f32.mrf.mxu0
  %v172 = vadd.f32 0.0, %v171
  %173 = vmatmul.bf16.gmra.mxu0 %v85
  %v174 = vpop.f32.mrf.mxu0
  %v175 = vadd.f32 0.0, %v174
  %v176 = vpop.f32.mrf.mxu0
  %v177 = vadd.f32 0.0, %v176
  %178 = vmatmul.bf16.gmra.mxu0 %v86
  %v179 = vpop.f32.mrf.mxu0
  %v180 = vadd.f32 0.0, %v179
  %v181 = vpop.f32.mrf.mxu0
  %v182 = vadd.f32 0.0, %v181
  %183 = vmatmul.bf16.gmra.mxu0 %v87
  %v184 = vpop.f32.mrf.mxu0
  %v185 = vadd.f32 0.0, %v184
  %v186 = vpop.f32.mrf.mxu0
  %v187 = vadd.f32 0.0, %v186
  %188 = vmatmul.bf16.gmra.mxu0 %v88
  %v189 = vpop.f32.mrf.mxu0
  %v190 = vadd.f32 0.0, %v189
  %v191 = vpop.f32.mrf.mxu0
  %v192 = vadd.f32 0.0, %v191
  %193 = vdwg.mxu0
  %v194 = vld [vmem:[%s2] sm:$0x1]
  %v196 = vperm.slane %v194, 0
  %v198 = vmul.f32 %v155, %v196
  %v199 = vmul.f32 %v157, %v196
  %v200 = vmul.f32 %v160, %v196
  %v201 = vmul.f32 %v162, %v196
  %v202 = vmul.f32 %v165, %v196
  %v203 = vmul.f32 %v167, %v196
  %v204 = vmul.f32 %v170, %v196
  %v205 = vmul.f32 %v172, %v196
  %v206 = vmul.f32 %v175, %v196
  %v207 = vmul.f32 %v177, %v196
  %v208 = vmul.f32 %v180, %v196
  %v209 = vmul.f32 %v182, %v196
  %v210 = vmul.f32 %v185, %v196
  %v211 = vmul.f32 %v187, %v196
  %v212 = vmul.f32 %v190, %v196
  %v213 = vmul.f32 %v192, %v196
  %v214 = vld [vmem:[%s3] sm:$0x1]
  %v216 = vperm.slane %v214, 0
  %v218 = vadd.f32 %v198, %v216
  %v219 = vadd.f32 %v199, %v216
  %v220 = vadd.f32 %v200, %v216
  %v221 = vadd.f32 %v201, %v216
  %v222 = vadd.f32 %v202, %v216
  %v223 = vadd.f32 %v203, %v216
  %v224 = vadd.f32 %v204, %v216
  %v225 = vadd.f32 %v205, %v216
  %v226 = vadd.f32 %v206, %v216
  %v227 = vadd.f32 %v207, %v216
  %v228 = vadd.f32 %v208, %v216
  %v229 = vadd.f32 %v209, %v216
  %v230 = vadd.f32 %v210, %v216
  %v231 = vadd.f32 %v211, %v216
  %v232 = vadd.f32 %v212, %v216
  %v233 = vadd.f32 %v213, %v216
  %234 = vst [vmem:[%s4] sm:$0xff] %v218
  %235 = vst [vmem:[%s4 + $0x8] sm:$0xff] %v219
  %236 = vst [vmem:[%s4 + $0x10] sm:$0xff] %v220
  %237 = vst [vmem:[%s4 + $0x18] sm:$0xff] %v221
  %238 = vst [vmem:[%s4 + $0x20] sm:$0xff] %v222
  %239 = vst [vmem:[%s4 + $0x28] sm:$0xff] %v223
  %240 = vst [vmem:[%s4 + $0x30] sm:$0xff] %v224
  %241 = vst [vmem:[%s4 + $0x38] sm:$0xff] %v225
  %242 = vst [vmem:[%s4 + $0x40] sm:$0xff] %v226
  %243 = vst [vmem:[%s4 + $0x48] sm:$0xff] %v227
  %244 = vst [vmem:[%s4 + $0x50] sm:$0xff] %v228
  %245 = vst [vmem:[%s4 + $0x58] sm:$0xff] %v229
  %246 = vst [vmem:[%s4 + $0x60] sm:$0xff] %v230
  %247 = vst [vmem:[%s4 + $0x68] sm:$0xff] %v231
  %248 = vst [vmem:[%s4 + $0x70] sm:$0xff] %v232
  %249 = vst [vmem:[%s4 + $0x78] sm:$0xff] %v233
  // Predicated region
  $region18: #{basic_block_forward.4} parent=0 // pred_check
    _
  $region19: #{basic_block_forward.4} parent=0 // pred_check_branch
    %251 = sbr.rel (0) target = $region21
  $region20: #{basic_block_forward.4} parent=0 // pred_region
    _
  $region21: #{basic_block_forward.4} parent=0 // pred_fallthru
    _
  // Predicated region
  $region22: #{basic_block_forward.4} parent=0 // pred_check
    _
  $region23: #{basic_block_forward.4} parent=0 // pred_check_branch
    %253 = sbr.rel (0) target = $region25
  $region24: #{basic_block_forward.4} parent=0 // pred_region
    _
  $region25: #{basic_block_forward.4} parent=0 // pred_fallthru
    _

// kernel: basic_block_forward.5
$region0: #{basic_block_forward.5}
  #allocation0 [shape = 'u32[]', space=smem, size = 0x4, offset = 0x4, fixed_abs, tag = 'smem constant byte address 0x4 - core index']
  #allocation1 [shape = 'u32[72,128]{1,0:T(1,128)}', space=vmem, size = 0x9000, scoped, tag = 'internal scratch']
  %s0 = inlined_call_operand.vmem [shape: bf16[2,82,128], index: 0, kind: input, shape index: {}]
  %s1 = inlined_call_operand.vmem [shape: bf16[1152,128], index: 1, kind: input, shape index: {}]
  %s2 = inlined_call_operand.vmem [shape: f32[1,128], index: 2, kind: input, shape index: {}]
  %s3 = inlined_call_operand.vmem [shape: f32[1,128], index: 3, kind: input, shape index: {}]
  %s4 = inlined_call_operand.vmem [shape: f32[2,64,128], index: 4, kind: input, shape index: {}]
  %s5 = inlined_call_operand.vmem [shape: f32[2,64,128], index: 5, kind: output, shape index: {}]
  %s6 = sld [smem:[#allocation0]]
  $region53: #{basic_block_forward.5} parent=0
    _
  %s8 = ssub.s32 1, %s6
  %s9 = scalar_select 0, %s8, %s6
  loop: start=0, step=1, limit=4
  $region2: #{basic_block_forward.5} parent=0 // loop_pre_header
    _
  $region3: #{basic_block_forward.5} parent=0 // loop_header
    %s11 = sphi 0, %s15
    %p12 = scmp.ge.s32.totalorder %s11, 4
    %s18 = sphi 0, %s30
    %s19 = sphi 0, %s26
    %s20 = sphi 0, %s18
    %s21 = sphi 0, %s19
    %s22 = sphi 0, %s20
    %s23 = sphi 0, %s21
    %s33 = sphi 0, %s35
    %s36 = sphi 0, %s33
    %s37 = sphi 0, %s36
    %s53 = sphi 0, %s37
    %s59 = sphi 0, %s61
    %s62 = sphi 0, %s59
    %s63 = sphi 0, %s62
    %s79 = sphi 0, %s63
    %s85 = sphi 0, %s87
    %s88 = sphi 0, %s85
    %s89 = sphi 0, %s88
    %s105 = sphi 0, %s89
    %s111 = sphi 0, %s113
    %s114 = sphi 0, %s111
    %s115 = sphi 0, %s114
    %s131 = sphi 0, %s115
    %s139 = sphi 0, %s141
    %s142 = sphi 0, %s139
    %s143 = sphi 0, %s142
    %s159 = sphi 0, %s143
    %s167 = sphi 0, %s169
    %s170 = sphi 0, %s167
    %s171 = sphi 0, %s170
    %s187 = sphi 0, %s171
  $region4: #{basic_block_forward.5} parent=0 // loop_header_branch
    %14 = sbr.rel (%p12) target = $region8
  $region5: #{basic_block_forward.5} parent=0 // loop_body
    %s16 = ssub.s32 %s11, 1
    %s17 = ssub.s32 %s11, 2
    %s24 = sadd.s32 1, %s19
    %p25 = scmp.ge.s32.totalorder %s24, 2
    %s26 = scalar_select %p25, 0, %s24
    %s27 = sadd.s32 1, %s18
    %s28 = scalar_select %p25, %s27, %s18
    %p29 = scmp.ge.s32.totalorder %s28, 1
    %s30 = scalar_select %p29, 0, %s28
    %s31 = ssub.s32 %s19, %s26
    %p32 = scmp.eq.s32.totalorder %s31, 0
    %s34 = sadd.s32 %s33, 1
    %s35 = scalar_select %p32, %s33, %s34
    %p38 = pneg %p32
    %p39 = scmp.eq.s32.totalorder %s11, 1
    %p40 = por %p38, %p39
    %p41 = scmp.ne.s32.totalorder %s33, %s36
    %p42 = scmp.eq.s32.totalorder %s11, 0
    %p43 = por %p41, %p42
    %p44 = scmp.ne.s32.totalorder %s33, %s36
    %p45 = scmp.eq.s32.totalorder %s16, 1
    %p46 = por %p44, %p45
    %p47 = scmp.ne.s32.totalorder %s36, %s37
    %p48 = scmp.eq.s32.totalorder %s16, 0
    %p49 = por %p47, %p48
    %p50 = scmp.ne.s32.totalorder %s36, %s37
    %p51 = scmp.eq.s32.totalorder %s17, 1
    %p52 = por %p50, %p51
    %p54 = scmp.ne.s32.totalorder %s37, %s53
    %p55 = scmp.eq.s32.totalorder %s17, 0
    %p56 = por %p54, %p55
    %s57 = ssub.s32 %s18, %s30
    %p58 = scmp.eq.s32.totalorder %s57, 0
    %s60 = sadd.s32 %s59, 1
    %s61 = scalar_select %p58, %s59, %s60
    %p64 = pneg %p58
    %p65 = scmp.eq.s32.totalorder %s11, 1
    %p66 = por %p64, %p65
    %p67 = scmp.ne.s32.totalorder %s59, %s62
    %p68 = scmp.eq.s32.totalorder %s11, 0
    %p69 = por %p67, %p68
    %p70 = scmp.ne.s32.totalorder %s59, %s62
    %p71 = scmp.eq.s32.totalorder %s16, 1
    %p72 = por %p70, %p71
    %p73 = scmp.ne.s32.totalorder %s62, %s63
    %p74 = scmp.eq.s32.totalorder %s16, 0
    %p75 = por %p73, %p74
    %p76 = scmp.ne.s32.totalorder %s62, %s63
    %p77 = scmp.eq.s32.totalorder %s17, 1
    %p78 = por %p76, %p77
    %p80 = scmp.ne.s32.totalorder %s63, %s79
    %p81 = scmp.eq.s32.totalorder %s17, 0
    %p82 = por %p80, %p81
    %s83 = ssub.s32 %s18, %s30
    %p84 = scmp.eq.s32.totalorder %s83, 0
    %s86 = sadd.s32 %s85, 1
    %s87 = scalar_select %p84, %s85, %s86
    %p90 = pneg %p84
    %p91 = scmp.eq.s32.totalorder %s11, 1
    %p92 = por %p90, %p91
    %p93 = scmp.ne.s32.totalorder %s85, %s88
    %p94 = scmp.eq.s32.totalorder %s11, 0
    %p95 = por %p93, %p94
    %p96 = scmp.ne.s32.totalorder %s85, %s88
    %p97 = scmp.eq.s32.totalorder %s16, 1
    %p98 = por %p96, %p97
    %p99 = scmp.ne.s32.totalorder %s88, %s89
    %p100 = scmp.eq.s32.totalorder %s16, 0
    %p101 = por %p99, %p100
    %p102 = scmp.ne.s32.totalorder %s88, %s89
    %p103 = scmp.eq.s32.totalorder %s17, 1
    %p104 = por %p102, %p103
    %p106 = scmp.ne.s32.totalorder %s89, %s105
    %p107 = scmp.eq.s32.totalorder %s17, 0
    %p108 = por %p106, %p107
    %s109 = ssub.s32 %s18, %s30
    %p110 = scmp.eq.s32.totalorder %s109, 0
    %s112 = sadd.s32 %s111, 1
    %s113 = scalar_select %p110, %s111, %s112
    %p116 = pneg %p110
    %p117 = scmp.eq.s32.totalorder %s11, 1
    %p118 = por %p116, %p117
    %p119 = scmp.ne.s32.totalorder %s111, %s114
    %p120 = scmp.eq.s32.totalorder %s11, 0
    %p121 = por %p119, %p120
    %p122 = scmp.ne.s32.totalorder %s111, %s114
    %p123 = scmp.eq.s32.totalorder %s16, 1
    %p124 = por %p122, %p123
    %p125 = scmp.ne.s32.totalorder %s114, %s115
    %p126 = scmp.eq.s32.totalorder %s16, 0
    %p127 = por %p125, %p126
    %p128 = scmp.ne.s32.totalorder %s114, %s115
    %p129 = scmp.eq.s32.totalorder %s17, 1
    %p130 = por %p128, %p129
    %p132 = scmp.ne.s32.totalorder %s115, %s131
    %p133 = scmp.eq.s32.totalorder %s17, 0
    %p134 = por %p132, %p133
    %s135 = ssub.s32 %s19, %s26
    %s136 = ssub.s32 %s18, %s30
    %s137 = sor.u32 %s135, %s136
    %p138 = scmp.eq.s32.totalorder %s137, 0
    %s140 = sadd.s32 %s139, 1
    %s141 = scalar_select %p138, %s139, %s140
    %p144 = pneg %p138
    %p145 = scmp.eq.s32.totalorder %s11, 1
    %p146 = por %p144, %p145
    %p147 = scmp.ne.s32.totalorder %s139, %s142
    %p148 = scmp.eq.s32.totalorder %s11, 0
    %p149 = por %p147, %p148
    %p150 = scmp.ne.s32.totalorder %s139, %s142
    %p151 = scmp.eq.s32.totalorder %s16, 1
    %p152 = por %p150, %p151
    %p153 = scmp.ne.s32.totalorder %s142, %s143
    %p154 = scmp.eq.s32.totalorder %s16, 0
    %p155 = por %p153, %p154
    %p156 = scmp.ne.s32.totalorder %s142, %s143
    %p157 = scmp.eq.s32.totalorder %s17, 1
    %p158 = por %p156, %p157
    %p160 = scmp.ne.s32.totalorder %s143, %s159
    %p161 = scmp.eq.s32.totalorder %s17, 0
    %p162 = por %p160, %p161
    %s163 = ssub.s32 %s19, %s26
    %s164 = ssub.s32 %s18, %s30
    %s165 = sor.u32 %s163, %s164
    %p166 = scmp.eq.s32.totalorder %s165, 0
    %s168 = sadd.s32 %s167, 1
    %s169 = scalar_select %p166, %s167, %s168
    %p172 = pneg %p166
    %p173 = scmp.eq.s32.totalorder %s11, 1
    %p174 = por %p172, %p173
    %p175 = scmp.ne.s32.totalorder %s167, %s170
    %p176 = scmp.eq.s32.totalorder %s11, 0
    %p177 = por %p175, %p176
    %p178 = scmp.ne.s32.totalorder %s167, %s170
    %p179 = scmp.eq.s32.totalorder %s16, 1
    %p180 = por %p178, %p179
    %p181 = scmp.ne.s32.totalorder %s170, %s171
    %p182 = scmp.eq.s32.totalorder %s16, 0
    %p183 = por %p181, %p182
    %p184 = scmp.ne.s32.totalorder %s170, %s171
    %p185 = scmp.eq.s32.totalorder %s17, 1
    %p186 = por %p184, %p185
    %p188 = scmp.ne.s32.totalorder %s171, %s187
    %p189 = scmp.eq.s32.totalorder %s17, 0
    %p190 = por %p188, %p189
    %p191 = scmp.le.s32.totalorder 1, %s11
    %p192 = scmp.lt.s32.totalorder %s11, 3
    %p193 = pnand %p191, %p192
    %p194 = pneg %p193
    // Predicated region
    $region9: #{basic_block_forward.5} parent=5 // pred_check
      _
    $region10: #{basic_block_forward.5} parent=5 // pred_check_branch
      %196 = sbr.rel (%p193) target = $region12
    $region11: #{basic_block_forward.5} parent=5 // pred_region
      %s197 = ssub.s32 %s11, 1
      // Predicated region
      $region13: #{basic_block_forward.5} parent=11 // pred_check
        %p198 = pneg %p75
      $region14: #{basic_block_forward.5} parent=11 // pred_check_branch
        %200 = sbr.rel (%p198) target = $region16
      $region15: #{basic_block_forward.5} parent=11 // pred_region
        %p201 = scmp.lt.s32.totalorder %s20, 0
        %s202 = scalar_select %p201, %s20, 0
        %s203 = smul.addr %s202, 4
        %s204 = scalar_lea.vmem %s1, %s203
      $region16: #{basic_block_forward.5} parent=11 // pred_fallthru
        _
      // Predicated region
      $region17: #{basic_block_forward.5} parent=11 // pred_check
        %p205 = pneg %p101
      $region18: #{basic_block_forward.5} parent=11 // pred_check_branch
        %207 = sbr.rel (%p205) target = $region20
      $region19: #{basic_block_forward.5} parent=11 // pred_region
        %p208 = scmp.lt.s32.totalorder %s20, 0
        %s209 = scalar_select %p208, %s20, 0
        %s210 = scalar_lea.vmem %s2, %s209
      $region20: #{basic_block_forward.5} parent=11 // pred_fallthru
        _
      // Predicated region
      $region21: #{basic_block_forward.5} parent=11 // pred_check
        %p211 = pneg %p127
      $region22: #{basic_block_forward.5} parent=11 // pred_check_branch
        %213 = sbr.rel (%p211) target = $region24
      $region23: #{basic_block_forward.5} parent=11 // pred_region
        %p214 = scmp.lt.s32.totalorder %s20, 0
        %s215 = scalar_select %p214, %s20, 0
        %s216 = scalar_lea.vmem %s3, %s215
      $region24: #{basic_block_forward.5} parent=11 // pred_fallthru
        _
    $region12: #{basic_block_forward.5} parent=5 // pred_fallthru
      _
    %p217 = scmp.lt.s32.totalorder %s11, 2
    // Predicated region
    $region25: #{basic_block_forward.5} parent=5 // pred_check
      %p218 = pneg %p217
    $region26: #{basic_block_forward.5} parent=5 // pred_check_branch
      %220 = sbr.rel (%p218) target = $region28
    $region27: #{basic_block_forward.5} parent=5 // pred_region
      // Predicated region
      $region29: #{basic_block_forward.5} parent=27 // pred_check
        %p221 = pneg %p43
      $region30: #{basic_block_forward.5} parent=27 // pred_check_branch
        %223 = sbr.rel (%p221) target = $region32
      $region31: #{basic_block_forward.5} parent=27 // pred_region
        %p224 = scmp.lt.s32.totalorder %s19, 1
        %s225 = scalar_select %p224, %s19, 1
        %s226 = smul.addr %s225, 11
        %s227 = smul.addr %s226, 4
        %s228 = scalar_lea.vmem %s0, %s227
      $region32: #{basic_block_forward.5} parent=27 // pred_fallthru
        _
      // Predicated region
      $region33: #{basic_block_forward.5} parent=27 // pred_check
        %p229 = pneg %p149
      $region34: #{basic_block_forward.5} parent=27 // pred_check_branch
        %231 = sbr.rel (%p229) target = $region36
      $region35: #{basic_block_forward.5} parent=27 // pred_region
        %p232 = scmp.lt.s32.totalorder %s19, 1
        %s233 = scalar_select %p232, %s19, 1
        %p234 = scmp.lt.s32.totalorder %s18, 0
        %s235 = scalar_select %p234, %s18, 0
        %s236 = smul.addr %s233, 8
        %s237 = sadd.s32 %s235, %s236
        %s238 = smul.addr %s237, 8
        %s239 = scalar_lea.vmem %s4, %s238
      $region36: #{basic_block_forward.5} parent=27 // pred_fallthru
        _
    $region28: #{basic_block_forward.5} parent=5 // pred_fallthru
      _
    %p240 = scmp.le.s32.totalorder 1, %s11
    %p241 = scmp.lt.s32.totalorder %s11, 3
    %p242 = pnand %p240, %p241
    %p243 = pneg %p242
    // Predicated region
    $region37: #{basic_block_forward.5} parent=5 // pred_check
      _
    $region38: #{basic_block_forward.5} parent=5 // pred_check_branch
      %245 = sbr.rel (%p242) target = $region40
    $region39: #{basic_block_forward.5} parent=5 // pred_region
      %s246 = ssub.s32 %s11, 1
      %p247 = scmp.lt.s32.totalorder %s21, 1
      %s248 = scalar_select %p247, %s21, 1
      %s249 = smul.addr %s248, 11
      %s250 = smul.addr %s249, 4
      %s251 = scalar_lea.vmem %s0, %s250
      %p252 = pneg %p49
      %p253 = pneg %p46
      %p254 = scmp.lt.s32.totalorder %s20, 0
      %s255 = scalar_select %p254, %s20, 0
      %s256 = smul.addr %s255, 4
      %s257 = scalar_lea.vmem %s1, %s256
      %p258 = pneg %p75
      %p259 = pneg %p72
      %p260 = scmp.lt.s32.totalorder %s20, 0
      %s261 = scalar_select %p260, %s20, 0
      %s262 = scalar_lea.vmem %s2, %s261
      %p263 = pneg %p101
      %p264 = pneg %p98
      %p265 = scmp.lt.s32.totalorder %s20, 0
      %s266 = scalar_select %p265, %s20, 0
      %s267 = scalar_lea.vmem %s3, %s266
      %p268 = pneg %p127
      %p269 = pneg %p124
      %p270 = scmp.lt.s32.totalorder %s21, 1
      %s271 = scalar_select %p270, %s21, 1
      %p272 = scmp.lt.s32.totalorder %s20, 0
      %s273 = scalar_select %p272, %s20, 0
      %s274 = smul.addr %s271, 8
      %s275 = sadd.s32 %s273, %s274
      %s276 = smul.addr %s275, 8
      %s277 = scalar_lea.vmem %s4, %s276
      %p278 = pneg %p155
      %p279 = pneg %p152
      %p280 = pneg %p183
      %p281 = pneg %p180
      %p282 = scmp.lt.s32.totalorder %s21, 1
      %s283 = scalar_select %p282, %s21, 1
      %p284 = scmp.lt.s32.totalorder %s20, 0
      %s285 = scalar_select %p284, %s20, 0
      %s286 = smul.addr %s283, 8
      %s287 = sadd.s32 %s285, %s286
      %s288 = smul.addr %s287, 8
      %s289 = scalar_lea.vmem %s5, %s288
      %p290 = scmp.lt.s32.totalorder %s21, 1
      %s291 = scalar_select %p290, %s21, 1
      %s292 = smul.addr %s291, 11
      %s293 = smul.addr %s292, 4
      %s294 = scalar_lea.vmem %s0, %s293
      %p295 = scmp.lt.s32.totalorder %s20, 0
      %s296 = scalar_select %p295, %s20, 0
      %s297 = smul.addr %s296, 4
      %s298 = scalar_lea.vmem %s1, %s297
      %p299 = scmp.lt.s32.totalorder %s20, 0
      %s300 = scalar_select %p299, %s20, 0
      %s301 = scalar_lea.vmem %s2, %s300
      %p302 = scmp.lt.s32.totalorder %s20, 0
      %s303 = scalar_select %p302, %s20, 0
      %s304 = scalar_lea.vmem %s3, %s303
      %p305 = scmp.lt.s32.totalorder %s21, 1
      %s306 = scalar_select %p305, %s21, 1
      %p307 = scmp.lt.s32.totalorder %s20, 0
      %s308 = scalar_select %p307, %s20, 0
      %s309 = smul.addr %s306, 8
      %s310 = sadd.s32 %s308, %s309
      %s311 = smul.addr %s310, 8
      %s312 = scalar_lea.vmem %s4, %s311
      %p313 = scmp.lt.s32.totalorder %s21, 1
      %s314 = scalar_select %p313, %s21, 1
      %p315 = scmp.lt.s32.totalorder %s20, 0
      %s316 = scalar_select %p315, %s20, 0
      %s317 = smul.addr %s314, 8
      %s318 = sadd.s32 %s316, %s317
      %s319 = smul.addr %s318, 8
      %s320 = scalar_lea.vmem %s5, %s319
      %v324 = vlaneseq
      %v325 = vshrl.u32 %v324, 7
      %v326 = vadd.s32 %v325, 8
      %v327 = vadd.s32 %v325, 16
      %v328 = vadd.s32 %v325, 24
      %v329 = vadd.s32 %v325, 32
      %v330 = vadd.s32 %v325, 40
      %v331 = vadd.s32 %v325, 48
      %v332 = vadd.s32 %v325, 56
      %vm333 = vcmp.lt.s32.totalorder %v325, 0
      %v334 = vsub.s32 0, %v325
      %v335 = vsel %vm333, %v334, %v325
      %v336 = vshrl.u32 %v335, 3
      %v337 = vand.u32 %v335, 7
      %v338 = vsub.s32 0, %v337
      %v339 = vsel %vm333, %v338, %v337
      %vm340 = vcmp.lt.s32.totalorder %v326, 0
      %v341 = vsub.s32 0, %v326
      %v342 = vsel %vm340, %v341, %v326
      %v343 = vshrl.u32 %v342, 3
      %v344 = vand.u32 %v342, 7
      %v345 = vsub.s32 0, %v344
      %v346 = vsel %vm340, %v345, %v344
      %vm347 = vcmp.lt.s32.totalorder %v327, 0
      %v348 = vsub.s32 0, %v327
      %v349 = vsel %vm347, %v348, %v327
      %v350 = vshrl.u32 %v349, 3
      %v351 = vand.u32 %v349, 7
      %v352 = vsub.s32 0, %v351
      %v353 = vsel %vm347, %v352, %v351
      %vm354 = vcmp.lt.s32.totalorder %v328, 0
      %v355 = vsub.s32 0, %v328
      %v356 = vsel %vm354, %v355, %v328
      %v357 = vshrl.u32 %v356, 3
      %v358 = vand.u32 %v356, 7
      %v359 = vsub.s32 0, %v358
      %v360 = vsel %vm354, %v359, %v358
      %vm361 = vcmp.lt.s32.totalorder %v329, 0
      %v362 = vsub.s32 0, %v329
      %v363 = vsel %vm361, %v362, %v329
      %v364 = vshrl.u32 %v363, 3
      %v365 = vand.u32 %v363, 7
      %v366 = vsub.s32 0, %v365
      %v367 = vsel %vm361, %v366, %v365
      %vm368 = vcmp.lt.s32.totalorder %v330, 0
      %v369 = vsub.s32 0, %v330
      %v370 = vsel %vm368, %v369, %v330
      %v371 = vshrl.u32 %v370, 3
      %v372 = vand.u32 %v370, 7
      %v373 = vsub.s32 0, %v372
      %v374 = vsel %vm368, %v373, %v372
      %vm375 = vcmp.lt.s32.totalorder %v331, 0
      %v376 = vsub.s32 0, %v331
      %v377 = vsel %vm375, %v376, %v331
      %v378 = vshrl.u32 %v377, 3
      %v379 = vand.u32 %v377, 7
      %v380 = vsub.s32 0, %v379
      %v381 = vsel %vm375, %v380, %v379
      %vm382 = vcmp.lt.s32.totalorder %v332, 0
      %v383 = vsub.s32 0, %v332
      %v384 = vsel %vm382, %v383, %v332
      %v385 = vshrl.u32 %v384, 3
      %v386 = vand.u32 %v384, 7
      %v387 = vsub.s32 0, %v386
      %v388 = vsel %vm382, %v387, %v386
      %vm389 = vcmp.ne.s32.totalorder %v339, 0
      %vm390 = vcmp.ne.s32.totalorder %v346, 0
      %vm391 = vcmp.ne.s32.totalorder %v353, 0
      %vm392 = vcmp.ne.s32.totalorder %v360, 0
      %vm393 = vcmp.ne.s32.totalorder %v367, 0
      %vm394 = vcmp.ne.s32.totalorder %v374, 0
      %vm395 = vcmp.ne.s32.totalorder %v381, 0
      %vm396 = vcmp.ne.s32.totalorder %v388, 0
      %vm397 = vcmp.lt.s32.totalorder %v339, 0
      %vm398 = vcmp.lt.s32.totalorder %v346, 0
      %vm399 = vcmp.lt.s32.totalorder %v353, 0
      %vm400 = vcmp.lt.s32.totalorder %v360, 0
      %vm401 = vcmp.lt.s32.totalorder %v367, 0
      %vm402 = vcmp.lt.s32.totalorder %v374, 0
      %vm403 = vcmp.lt.s32.totalorder %v381, 0
      %vm404 = vcmp.lt.s32.totalorder %v388, 0
      %vm405 = vmand %vm397, %vm389
      %vm406 = vmand %vm398, %vm390
      %vm407 = vmand %vm399, %vm391
      %vm408 = vmand %vm400, %vm392
      %vm409 = vmand %vm401, %vm393
      %vm410 = vmand %vm402, %vm394
      %vm411 = vmand %vm403, %vm395
      %vm412 = vmand %vm404, %vm396
      %v413 = vadd.s32 %v339, 8
      %v414 = vadd.s32 %v346, 8
      %v415 = vadd.s32 %v353, 8
      %v416 = vadd.s32 %v360, 8
      %v417 = vadd.s32 %v367, 8
      %v418 = vadd.s32 %v374, 8
      %v419 = vadd.s32 %v381, 8
      %v420 = vadd.s32 %v388, 8
      %v421 = vsel %vm405, %v413, %v339
      %v422 = vsel %vm406, %v414, %v346
      %v423 = vsel %vm407, %v415, %v353
      %v424 = vsel %vm408, %v416, %v360
      %v425 = vsel %vm409, %v417, %v367
      %v426 = vsel %vm410, %v418, %v374
      %v427 = vsel %vm411, %v419, %v381
      %v428 = vsel %vm412, %v420, %v388
      %v429 = vld [vmem:[%s294] sm:$0xf]
      %v430 = vld [vmem:[%s294 + $0x4] sm:$0xf]
      %v431 = vld [vmem:[%s294 + $0x8] sm:$0xf]
      %v432 = vld [vmem:[%s294 + $0xc] sm:$0xf]
      %v433 = vld [vmem:[%s294 + $0x10] sm:$0xf]
      %v434 = vld [vmem:[%s294 + $0x14] sm:$0xf]
      %v435 = vld [vmem:[%s294 + $0x18] sm:$0xf]
      %v436 = vld [vmem:[%s294 + $0x1c] sm:$0xf]
      %v437 = vadd.s32 %v421, 4294967295
      %v438 = vadd.s32 %v422, 4294967295
      %v439 = vadd.s32 %v423, 4294967295
      %v440 = vadd.s32 %v424, 4294967295
      %v441 = vadd.s32 %v425, 4294967295
      %v442 = vadd.s32 %v426, 4294967295
      %v443 = vadd.s32 %v427, 4294967295
      %v444 = vadd.s32 %v428, 4294967295
      %vm445 = vcmp.ge.s32.totalorder %v437, 0
      %vm446 = vcmp.ge.s32.totalorder %v438, 0
      %vm447 = vcmp.ge.s32.totalorder %v439, 0
      %vm448 = vcmp.ge.s32.totalorder %v440, 0
      %vm449 = vcmp.ge.s32.totalorder %v441, 0
      %vm450 = vcmp.ge.s32.totalorder %v442, 0
      %vm451 = vcmp.ge.s32.totalorder %v443, 0
      %vm452 = vcmp.ge.s32.totalorder %v444, 0
      %vm453 = vcmp.lt.s32.totalorder %v437, 8
      %vm454 = vcmp.lt.s32.totalorder %v438, 8
      %vm455 = vcmp.lt.s32.totalorder %v439, 8
      %vm456 = vcmp.lt.s32.totalorder %v440, 8
      %vm457 = vcmp.lt.s32.totalorder %v441, 8
      %vm458 = vcmp.lt.s32.totalorder %v442, 8
      %vm459 = vcmp.lt.s32.totalorder %v443, 8
      %vm460 = vcmp.lt.s32.totalorder %v444, 8
      %vm461 = vmand %vm445, %vm453
      %vm462 = vmand %vm446, %vm454
      %vm463 = vmand %vm447, %vm455
      %vm464 = vmand %vm448, %vm456
      %vm465 = vmand %vm449, %vm457
      %vm466 = vmand %vm450, %vm458
      %vm467 = vmand %vm451, %vm459
      %vm468 = vmand %vm452, %vm460
      %v469 = vsel %vm461, 1, 0
      %v470 = vsel %vm462, 1, 0
      %v471 = vsel %vm463, 1, 0
      %v472 = vsel %vm464, 1, 0
      %v473 = vsel %vm465, 1, 0
      %v474 = vsel %vm466, 1, 0
      %v475 = vsel %vm467, 1, 0
      %v476 = vsel %vm468, 1, 0
      %vm477 = vcmp.eq.s32.totalorder %v469, 1
      %vm478 = vcmp.eq.s32.totalorder %v470, 1
      %vm479 = vcmp.eq.s32.totalorder %v471, 1
      %vm480 = vcmp.eq.s32.totalorder %v472, 1
      %vm481 = vcmp.eq.s32.totalorder %v473, 1
      %vm482 = vcmp.eq.s32.totalorder %v474, 1
      %vm483 = vcmp.eq.s32.totalorder %v475, 1
      %vm484 = vcmp.eq.s32.totalorder %v476, 1
      %vm485 = vmpackc.low %vm477, %vm477
      %vm486 = vmpackc.low %vm478, %vm478
      %vm487 = vmpackc.low %vm479, %vm479
      %vm488 = vmpackc.low %vm480, %vm480
      %vm489 = vmpackc.low %vm481, %vm481
      %vm490 = vmpackc.low %vm482, %vm482
      %vm491 = vmpackc.low %vm483, %vm483
      %vm492 = vmpackc.low %vm484, %vm484
      %v493 = vsel %vm485, %v429, 0
      %v494 = vsel %vm486, %v430, 0
      %v495 = vsel %vm487, %v431, 0
      %v496 = vsel %vm488, %v432, 0
      %v497 = vsel %vm489, %v433, 0
      %v498 = vsel %vm490, %v434, 0
      %v499 = vsel %vm491, %v435, 0
      %v500 = vsel %vm492, %v436, 0
      %v501 = vld [vmem:[%s298] sm:$0xf]
      %v502 = vld [vmem:[%s298 + $0x4] sm:$0xf]
      %v503 = vld [vmem:[%s298 + $0x8] sm:$0xf]
      %v504 = vld [vmem:[%s298 + $0xc] sm:$0xf]
      %v505 = vld [vmem:[%s298 + $0x10] sm:$0xf]
      %v506 = vld [vmem:[%s298 + $0x14] sm:$0xf]
      %v507 = vld [vmem:[%s298 + $0x18] sm:$0xf]
      %v508 = vld [vmem:[%s298 + $0x1c] sm:$0xf]
      %v509 = vld [vmem:[%s298 + $0x20] sm:$0xf]
      %v510 = vld [vmem:[%s298 + $0x24] sm:$0xf]
      %v511 = vld [vmem:[%s298 + $0x28] sm:$0xf]
      %v512 = vld [vmem:[%s298 + $0x2c] sm:$0xf]
      %v513 = vld [vmem:[%s298 + $0x30] sm:$0xf]
      %v514 = vld [vmem:[%s298 + $0x34] sm:$0xf]
      %v515 = vld [vmem:[%s298 + $0x38] sm:$0xf]
      %v516 = vld [vmem:[%s298 + $0x3c] sm:$0xf]
      %v517 = vld [vmem:[%s294 + $0x20] sm:$0x1]
      %v518 = vld [vmem:[%s298 + $0x40] sm:$0xf]
      %v519 = vld [vmem:[%s298 + $0x44] sm:$0xf]
      %v520 = vld [vmem:[%s298 + $0x48] sm:$0xf]
      %v521 = vld [vmem:[%s298 + $0x4c] sm:$0xf]
      %v522 = vld [vmem:[%s298 + $0x50] sm:$0xf]
      %v523 = vld [vmem:[%s298 + $0x54] sm:$0xf]
      %v524 = vld [vmem:[%s298 + $0x58] sm:$0xf]
      %v525 = vld [vmem:[%s298 + $0x5c] sm:$0xf]
      %v526 = vld [vmem:[%s298 + $0x60] sm:$0xf]
      %v527 = vld [vmem:[%s298 + $0x64] sm:$0xf]
      %v528 = vld [vmem:[%s298 + $0x68] sm:$0xf]
      %v529 = vld [vmem:[%s298 + $0x6c] sm:$0xf]
      %v530 = vld [vmem:[%s298 + $0x70] sm:$0xf]
      %v531 = vld [vmem:[%s298 + $0x74] sm:$0xf]
      %v532 = vld [vmem:[%s298 + $0x78] sm:$0xf]
      %v533 = vld [vmem:[%s298 + $0x7c] sm:$0xf]
      %v543 = vunpack.c.l.b16 %v429
      %v544 = vunpack.c.l.b16 %v430
      %v545 = vunpack.c.l.b16 %v431
      %v546 = vunpack.c.l.b16 %v432
      %v547 = vunpack.c.l.b16 %v433
      %v548 = vunpack.c.l.b16 %v434
      %v549 = vunpack.c.l.b16 %v435
      %v550 = vunpack.c.l.b16 %v436
      %v551 = vunpack.c.l.b16 %v517
      %v552 = vpack.c.b16 %v544, %v543
      %v553 = vpack.c.b16 %v546, %v545
      %v554 = vpack.c.b16 %v548, %v547
      %v555 = vpack.c.b16 %v550, %v549
      %v556 = vpack.c.b16 %v551, %v551
      %vm557 = vsmask.f32 7424
      %v559 = vshrl.u32 %v552, 16
      %v561 = vshll.u32 %v552, 16
      %v563 = vrot.slane %v561, 1
      %v564 = vor.u32 %v559, %v563
      %v566 = vshll.u32 %v553, 16
      %v568 = vrot.slane %v566, 1
      %v569 = vsel %vm557, %v564, %v568
      %v570 = vshrl.u32 %v553, 16
      %v572 = vor.u32 %v570, %v568
      %v574 = vshll.u32 %v554, 16
      %v576 = vrot.slane %v574, 1
      %v577 = vsel %vm557, %v572, %v576
      %v578 = vshrl.u32 %v554, 16
      %v580 = vor.u32 %v578, %v576
      %v582 = vshll.u32 %v555, 16
      %v584 = vrot.slane %v582, 1
      %v585 = vsel %vm557, %v580, %v584
      %v586 = vshrl.u32 %v555, 16
      %v588 = vor.u32 %v586, %v584
      %v590 = vshll.u32 %v556, 16
      %v592 = vrot.slane %v590, 1
      %v593 = vsel %vm557, %v588, %v592
      %v614 = vunpack.c.l.b16 %v518
      %v615 = vunpack.c.l.b16 %v519
      %v616 = vunpack.c.l.b16 %v520
      %v617 = vunpack.c.l.b16 %v521
      %v618 = vunpack.c.l.b16 %v522
      %v619 = vunpack.c.l.b16 %v523
      %v620 = vunpack.c.l.b16 %v524
      %v621 = vunpack.c.l.b16 %v525
      %v622 = vunpack.c.l.b16 %v526
      %v623 = vunpack.c.l.b16 %v527
      %v624 = vunpack.c.l.b16 %v528
      %v625 = vunpack.c.l.b16 %v529
      %v626 = vunpack.c.l.b16 %v530
      %v627 = vunpack.c.l.b16 %v531
      %v628 = vunpack.c.l.b16 %v532
      %v629 = vunpack.c.l.b16 %v533
      %v630 = vpack.c.b16 %v615, %v614
      %v631 = vpack.c.b16 %v617, %v616
      %v632 = vpack.c.b16 %v619, %v618
      %v633 = vpack.c.b16 %v621, %v620
      %v634 = vpack.c.b16 %v623, %v622
      %v635 = vpack.c.b16 %v625, %v624
      %v636 = vpack.c.b16 %v627, %v626
      %v637 = vpack.c.b16 %v629, %v628
      %646 = vmatpush.bf16.msra.mxu0 %v637
      %647 = vmatpush.bf16.msra.mxu0 %v636
      %648 = vmatpush.bf16.msra.mxu0 %v635
      %649 = vmatpush.bf16.msra.mxu0 %v634
      %650 = vmatpush.bf16.msra.mxu0 %v633
      %651 = vmatpush.bf16.msra.mxu0 %v632
      %652 = vmatpush.bf16.msra.mxu0 %v631
      %653 = vmatpush.bf16.msra.mxu0 %v630
      %654 = vmatmul.bf16.gmra.mxu0 %v569
      %v655 = vpop.f32.mrf.mxu0
      %v656 = vadd.f32 0.0, %v655
      %v657 = vpop.f32.mrf.mxu0
      %v658 = vadd.f32 0.0, %v657
      %659 = vmatmul.bf16.gmra.mxu0 %v577
      %v660 = vpop.f32.mrf.mxu0
      %v661 = vadd.f32 0.0, %v660
      %v662 = vpop.f32.mrf.mxu0
      %v663 = vadd.f32 0.0, %v662
      %664 = vmatmul.bf16.gmra.mxu0 %v585
      %v665 = vpop.f32.mrf.mxu0
      %v666 = vadd.f32 0.0, %v665
      %v667 = vpop.f32.mrf.mxu0
      %v668 = vadd.f32 0.0, %v667
      %669 = vmatmul.bf16.gmra.mxu0 %v593
      %v670 = vpop.f32.mrf.mxu0
      %v671 = vadd.f32 0.0, %v670
      %v672 = vpop.f32.mrf.mxu0
      %v673 = vadd.f32 0.0, %v672
      %674 = vdwg.mxu0
      %v683 = vunpack.c.l.b16 %v493
      %v684 = vunpack.c.l.b16 %v494
      %v685 = vunpack.c.l.b16 %v495
      %v686 = vunpack.c.l.b16 %v496
      %v687 = vunpack.c.l.b16 %v497
      %v688 = vunpack.c.l.b16 %v498
      %v689 = vunpack.c.l.b16 %v499
      %v690 = vunpack.c.l.b16 %v500
      %v691 = vpack.c.b16 %v684, %v683
      %v692 = vpack.c.b16 %v686, %v685
      %v693 = vpack.c.b16 %v688, %v687
      %v694 = vpack.c.b16 %v690, %v689
      %v715 = vunpack.c.l.b16 %v501
      %v716 = vunpack.c.l.b16 %v502
      %v717 = vunpack.c.l.b16 %v503
      %v718 = vunpack.c.l.b16 %v504
      %v719 = vunpack.c.l.b16 %v505
      %v720 = vunpack.c.l.b16 %v506
      %v721 = vunpack.c.l.b16 %v507
      %v722 = vunpack.c.l.b16 %v508
      %v723 = vunpack.c.l.b16 %v509
      %v724 = vunpack.c.l.b16 %v510
      %v725 = vunpack.c.l.b16 %v511
      %v726 = vunpack.c.l.b16 %v512
      %v727 = vunpack.c.l.b16 %v513
      %v728 = vunpack.c.l.b16 %v514
      %v729 = vunpack.c.l.b16 %v515
      %v730 = vunpack.c.l.b16 %v516
      %v731 = vpack.c.b16 %v716, %v715
      %v732 = vpack.c.b16 %v718, %v717
      %v733 = vpack.c.b16 %v720, %v719
      %v734 = vpack.c.b16 %v722, %v721
      %v735 = vpack.c.b16 %v724, %v723
      %v736 = vpack.c.b16 %v726, %v725
      %v737 = vpack.c.b16 %v728, %v727
      %v738 = vpack.c.b16 %v730, %v729
      %747 = vmatpush.bf16.msra.mxu0 %v738
      %748 = vmatpush.bf16.msra.mxu0 %v737
      %749 = vmatpush.bf16.msra.mxu0 %v736
      %750 = vmatpush.bf16.msra.mxu0 %v735
      %751 = vmatpush.bf16.msra.mxu0 %v734
      %752 = vmatpush.bf16.msra.mxu0 %v733
      %753 = vmatpush.bf16.msra.mxu0 %v732
      %754 = vmatpush.bf16.msra.mxu0 %v731
      %755 = vmatmul.bf16.gmra.mxu0 %v691
      %v756 = vpop.f32.mrf.mxu0
      %v757 = vadd.f32 %v656, %v756
      %v758 = vpop.f32.mrf.mxu0
      %v759 = vadd.f32 %v658, %v758
      %760 = vmatmul.bf16.gmra.mxu0 %v692
      %v761 = vpop.f32.mrf.mxu0
      %v762 = vadd.f32 %v661, %v761
      %v763 = vpop.f32.mrf.mxu0
      %v764 = vadd.f32 %v663, %v763
      %765 = vmatmul.bf16.gmra.mxu0 %v693
      %v766 = vpop.f32.mrf.mxu0
      %v767 = vadd.f32 %v666, %v766
      %v768 = vpop.f32.mrf.mxu0
      %v769 = vadd.f32 %v668, %v768
      %770 = vmatmul.bf16.gmra.mxu0 %v694
      %v771 = vpop.f32.mrf.mxu0
      %v772 = vadd.f32 %v671, %v771
      %v773 = vpop.f32.mrf.mxu0
      %v774 = vadd.f32 %v673, %v773
      %775 = vdwg.mxu0
      %v776 = vld [vmem:[%s294] sm:$0xe]
      %v777 = vadd.s32 %v421, 1
      %v778 = vadd.s32 %v422, 1
      %v779 = vadd.s32 %v423, 1
      %v780 = vadd.s32 %v424, 1
      %v781 = vadd.s32 %v425, 1
      %v782 = vadd.s32 %v426, 1
      %v783 = vadd.s32 %v427, 1
      %v784 = vadd.s32 %v428, 1
      %vm785 = vcmp.ge.s32.totalorder %v777, 0
      %vm786 = vcmp.ge.s32.totalorder %v778, 0
      %vm787 = vcmp.ge.s32.totalorder %v779, 0
      %vm788 = vcmp.ge.s32.totalorder %v780, 0
      %vm789 = vcmp.ge.s32.totalorder %v781, 0
      %vm790 = vcmp.ge.s32.totalorder %v782, 0
      %vm791 = vcmp.ge.s32.totalorder %v783, 0
      %vm792 = vcmp.ge.s32.totalorder %v784, 0
      %vm793 = vcmp.lt.s32.totalorder %v777, 8
      %vm794 = vcmp.lt.s32.totalorder %v778, 8
      %vm795 = vcmp.lt.s32.totalorder %v779, 8
      %vm796 = vcmp.lt.s32.totalorder %v780, 8
      %vm797 = vcmp.lt.s32.totalorder %v781, 8
      %vm798 = vcmp.lt.s32.totalorder %v782, 8
      %vm799 = vcmp.lt.s32.totalorder %v783, 8
      %vm800 = vcmp.lt.s32.totalorder %v784, 8
      %vm801 = vmand %vm785, %vm793
      %vm802 = vmand %vm786, %vm794
      %vm803 = vmand %vm787, %vm795
      %vm804 = vmand %vm788, %vm796
      %vm805 = vmand %vm789, %vm797
      %vm806 = vmand %vm790, %vm798
      %vm807 = vmand %vm791, %vm799
      %vm808 = vmand %vm792, %vm800
      %v809 = vsel %vm801, 1, 0
      %v810 = vsel %vm802, 1, 0
      %v811 = vsel %vm803, 1, 0
      %v812 = vsel %vm804, 1, 0
      %v813 = vsel %vm805, 1, 0
      %v814 = vsel %vm806, 1, 0
      %v815 = vsel %vm807, 1, 0
      %v816 = vsel %vm808, 1, 0
      %vm817 = vcmp.eq.s32.totalorder %v809, 1
      %vm818 = vcmp.eq.s32.totalorder %v810, 1
      %vm819 = vcmp.eq.s32.totalorder %v811, 1
      %vm820 = vcmp.eq.s32.totalorder %v812, 1
      %vm821 = vcmp.eq.s32.totalorder %v813, 1
      %vm822 = vcmp.eq.s32.totalorder %v814, 1
      %vm823 = vcmp.eq.s32.totalorder %v815, 1
      %vm824 = vcmp.eq.s32.totalorder %v816, 1
      %vm825 = vmpackc.low %vm817, %vm817
      %vm826 = vmpackc.low %vm818, %vm818
      %vm827 = vmpackc.low %vm819, %vm819
      %vm828 = vmpackc.low %vm820, %vm820
      %vm829 = vmpackc.low %vm821, %vm821
      %vm830 = vmpackc.low %vm822, %vm822
      %vm831 = vmpackc.low %vm823, %vm823
      %vm832 = vmpackc.low %vm824, %vm824
      %v833 = vsel %vm825, 65537, 0
      %v834 = vsel %vm826, 65537, 0
      %v835 = vsel %vm827, 65537, 0
      %v836 = vsel %vm828, 65537, 0
      %v837 = vsel %vm829, 65537, 0
      %v838 = vsel %vm830, 65537, 0
      %v839 = vsel %vm831, 65537, 0
      %v840 = vsel %vm832, 65537, 0
      %vm841 = vcmask 1040384
      %vm842 = vcmask 1044484
      %vm843 = vmor %vm841, %vm842
      %v844 = vrot.slane %v833, 7
      %v845 = vrot.slane %v844, 4
      %v846 = vrot.slane %v834, 7
      %v847 = vsel %vm843, %v845, %v846
      %v848 = vrot.slane %v846, 4
      %v849 = vrot.slane %v835, 7
      %v850 = vsel %vm843, %v848, %v849
      %v851 = vrot.slane %v849, 4
      %v852 = vrot.slane %v836, 7
      %v853 = vsel %vm843, %v851, %v852
      %v854 = vrot.slane %v852, 4
      %v855 = vrot.slane %v837, 7
      %v856 = vsel %vm843, %v854, %v855
      %v857 = vrot.slane %v855, 4
      %v858 = vrot.slane %v838, 7
      %v859 = vsel %vm843, %v857, %v858
      %v860 = vrot.slane %v858, 4
      %v861 = vrot.slane %v839, 7
      %v862 = vsel %vm843, %v860, %v861
      %v863 = vrot.slane %v861, 4
      %v864 = vrot.slane %v840, 7
      %v865 = vsel %vm843, %v863, %v864
      %v866 = vrot.slane %v864, 4
      %v867 = vunpack.c.l.b16 %v844
      %v868 = vunpack.c.h.b16 %v844
      %v869 = vunpack.c.l.b16 0
      %v870 = vunpack.c.h.b16 0
      %vm871 = vcmp.ne.s32.totalorder %v867, %v869
      %vm872 = vcmp.ne.s32.totalorder %v868, %v870
      %vm873 = vmpackc.low %vm872, %vm871
      %v874 = vunpack.c.l.b16 %v847
      %v875 = vunpack.c.h.b16 %v847
      %v876 = vunpack.c.l.b16 0
      %v877 = vunpack.c.h.b16 0
      %vm878 = vcmp.ne.s32.totalorder %v874, %v876
      %vm879 = vcmp.ne.s32.totalorder %v875, %v877
      %vm880 = vmpackc.low %vm879, %vm878
      %v881 = vunpack.c.l.b16 %v850
      %v882 = vunpack.c.h.b16 %v850
      %v883 = vunpack.c.l.b16 0
      %v884 = vunpack.c.h.b16 0
      %vm885 = vcmp.ne.s32.totalorder %v881, %v883
      %vm886 = vcmp.ne.s32.totalorder %v882, %v884
      %vm887 = vmpackc.low %vm886, %vm885
      %v888 = vunpack.c.l.b16 %v853
      %v889 = vunpack.c.h.b16 %v853
      %v890 = vunpack.c.l.b16 0
      %v891 = vunpack.c.h.b16 0
      %vm892 = vcmp.ne.s32.totalorder %v888, %v890
      %vm893 = vcmp.ne.s32.totalorder %v889, %v891
      %vm894 = vmpackc.low %vm893, %vm892
      %v895 = vunpack.c.l.b16 %v856
      %v896 = vunpack.c.h.b16 %v856
      %v897 = vunpack.c.l.b16 0
      %v898 = vunpack.c.h.b16 0
      %vm899 = vcmp.ne.s32.totalorder %v895, %v897
      %vm900 = vcmp.ne.s32.totalorder %v896, %v898
      %vm901 = vmpackc.low %vm900, %vm899
      %v902 = vunpack.c.l.b16 %v859
      %v903 = vunpack.c.h.b16 %v859
      %v904 = vunpack.c.l.b16 0
      %v905 = vunpack.c.h.b16 0
      %vm906 = vcmp.ne.s32.totalorder %v902, %v904
      %vm907 = vcmp.ne.s32.totalorder %v903, %v905
      %vm908 = vmpackc.low %vm907, %vm906
      %v909 = vunpack.c.l.b16 %v862
      %v910 = vunpack.c.h.b16 %v862
      %v911 = vunpack.c.l.b16 0
      %v912 = vunpack.c.h.b16 0
      %vm913 = vcmp.ne.s32.totalorder %v909, %v911
      %vm914 = vcmp.ne.s32.totalorder %v910, %v912
      %vm915 = vmpackc.low %vm914, %vm913
      %v916 = vunpack.c.l.b16 %v865
      %v917 = vunpack.c.h.b16 %v865
      %v918 = vunpack.c.l.b16 0
      %v919 = vunpack.c.h.b16 0
      %vm920 = vcmp.ne.s32.totalorder %v916, %v918
      %vm921 = vcmp.ne.s32.totalorder %v917, %v919
      %vm922 = vmpackc.low %vm921, %vm920
      %v923 = vunpack.c.l.b16 %v866
      %v924 = vunpack.c.h.b16 %v866
      %v925 = vunpack.c.l.b16 0
      %v926 = vunpack.c.h.b16 0
      %vm927 = vcmp.ne.s32.totalorder %v923, %v925
      %vm928 = vcmp.ne.s32.totalorder %v924, %v926
      %vm929 = vmpackc.low %vm928, %vm927
      %v930 = vsel %vm873, %v776, 0
      %v931 = vsel %vm880, %v430, 0
      %v932 = vsel %vm887, %v431, 0
      %v933 = vsel %vm894, %v432, 0
      %v934 = vsel %vm901, %v433, 0
      %v935 = vsel %vm908, %v434, 0
      %v936 = vsel %vm915, %v435, 0
      %v937 = vsel %vm922, %v436, 0
      %v938 = vsel %vm929, %v517, 0
      %v939 = vld [vmem:[%s298 + $0x80] sm:$0xf]
      %v940 = vld [vmem:[%s298 + $0x84] sm:$0xf]
      %v941 = vld [vmem:[%s298 + $0x88] sm:$0xf]
      %v942 = vld [vmem:[%s298 + $0x8c] sm:$0xf]
      %v943 = vld [vmem:[%s298 + $0x90] sm:$0xf]
      %v944 = vld [vmem:[%s298 + $0x94] sm:$0xf]
      %v945 = vld [vmem:[%s298 + $0x98] sm:$0xf]
      %v946 = vld [vmem:[%s298 + $0x9c] sm:$0xf]
      %v947 = vld [vmem:[%s298 + $0xa0] sm:$0xf]
      %v948 = vld [vmem:[%s298 + $0xa4] sm:$0xf]
      %v949 = vld [vmem:[%s298 + $0xa8] sm:$0xf]
      %v950 = vld [vmem:[%s298 + $0xac] sm:$0xf]
      %v951 = vld [vmem:[%s298 + $0xb0] sm:$0xf]
      %v952 = vld [vmem:[%s298 + $0xb4] sm:$0xf]
      %v953 = vld [vmem:[%s298 + $0xb8] sm:$0xf]
      %v954 = vld [vmem:[%s298 + $0xbc] sm:$0xf]
      %v964 = vunpack.c.l.b16 %v930
      %v965 = vunpack.c.l.b16 %v931
      %v966 = vunpack.c.l.b16 %v932
      %v967 = vunpack.c.l.b16 %v933
      %v968 = vunpack.c.l.b16 %v934
      %v969 = vunpack.c.l.b16 %v935
      %v970 = vunpack.c.l.b16 %v936
      %v971 = vunpack.c.l.b16 %v937
      %v972 = vunpack.c.l.b16 %v938
      %v973 = vpack.c.b16 %v965, %v964
      %v974 = vpack.c.b16 %v967, %v966
      %v975 = vpack.c.b16 %v969, %v968
      %v976 = vpack.c.b16 %v971, %v970
      %v977 = vpack.c.b16 %v972, %v972
      %vm978 = vcmask 1046528
      %v979 = vrot.slane %v973, 1
      %v980 = vrot.slane %v974, 1
      %v981 = vsel %vm978, %v979, %v980
      %v982 = vrot.slane %v975, 1
      %v983 = vsel %vm978, %v980, %v982
      %v984 = vrot.slane %v976, 1
      %v985 = vsel %vm978, %v982, %v984
      %v986 = vrot.slane %v977, 1
      %v987 = vsel %vm978, %v984, %v986
      %v1008 = vunpack.c.l.b16 %v939
      %v1009 = vunpack.c.l.b16 %v940
      %v1010 = vunpack.c.l.b16 %v941
      %v1011 = vunpack.c.l.b16 %v942
      %v1012 = vunpack.c.l.b16 %v943
      %v1013 = vunpack.c.l.b16 %v944
      %v1014 = vunpack.c.l.b16 %v945
      %v1015 = vunpack.c.l.b16 %v946
      %v1016 = vunpack.c.l.b16 %v947
      %v1017 = vunpack.c.l.b16 %v948
      %v1018 = vunpack.c.l.b16 %v949
      %v1019 = vunpack.c.l.b16 %v950
      %v1020 = vunpack.c.l.b16 %v951
      %v1021 = vunpack.c.l.b16 %v952
      %v1022 = vunpack.c.l.b16 %v953
      %v1023 = vunpack.c.l.b16 %v954
      %v1024 = vpack.c.b16 %v1009, %v1008
      %v1025 = vpack.c.b16 %v1011, %v1010
      %v1026 = vpack.c.b16 %v1013, %v1012
      %v1027 = vpack.c.b16 %v1015, %v1014
      %v1028 = vpack.c.b16 %v1017, %v1016
      %v1029 = vpack.c.b16 %v1019, %v1018
      %v1030 = vpack.c.b16 %v1021, %v1020
      %v1031 = vpack.c.b16 %v1023, %v1022
      %1040 = vmatpush.bf16.msra.mxu0 %v1031
      %1041 = vmatpush.bf16.msra.mxu0 %v1030
      %1042 = vmatpush.bf16.msra.mxu0 %v1029
      %1043 = vmatpush.bf16.msra.mxu0 %v1028
      %1044 = vmatpush.bf16.msra.mxu0 %v1027
      %1045 = vmatpush.bf16.msra.mxu0 %v1026
      %1046 = vmatpush.bf16.msra.mxu0 %v1025
      %1047 = vmatpush.bf16.msra.mxu0 %v1024
      %1048 = vmatmul.bf16.gmra.mxu0 %v981
      %v1049 = vpop.f32.mrf.mxu0
      %v1050 = vadd.f32 0.0, %v1049
      %v1051 = vpop.f32.mrf.mxu0
      %v1052 = vadd.f32 0.0, %v1051
      %1053 = vmatmul.bf16.gmra.mxu0 %v983
      %v1054 = vpop.f32.mrf.mxu0
      %v1055 = vadd.f32 0.0, %v1054
      %v1056 = vpop.f32.mrf.mxu0
      %v1057 = vadd.f32 0.0, %v1056
      %1058 = vmatmul.bf16.gmra.mxu0 %v985
      %v1059 = vpop.f32.mrf.mxu0
      %v1060 = vadd.f32 0.0, %v1059
      %v1061 = vpop.f32.mrf.mxu0
      %v1062 = vadd.f32 0.0, %v1061
      %1063 = vmatmul.bf16.gmra.mxu0 %v987
      %v1064 = vpop.f32.mrf.mxu0
      %v1065 = vadd.f32 0.0, %v1064
      %v1066 = vpop.f32.mrf.mxu0
      %v1067 = vadd.f32 0.0, %v1066
      %1068 = vdwg.mxu0
      %v1069 = vadd.f32 %v757, %v1050
      %v1070 = vadd.f32 %v759, %v1052
      %v1071 = vadd.f32 %v762, %v1055
      %v1072 = vadd.f32 %v764, %v1057
      %v1073 = vadd.f32 %v767, %v1060
      %v1074 = vadd.f32 %v769, %v1062
      %v1075 = vadd.f32 %v772, %v1065
      %v1076 = vadd.f32 %v774, %v1067
      %v1077 = vld [vmem:[%s294 + $0x20] sm:$0xf]
      %v1078 = vsel %vm485, %v430, 0
      %v1079 = vsel %vm486, %v431, 0
      %v1080 = vsel %vm487, %v432, 0
      %v1081 = vsel %vm488, %v433, 0
      %v1082 = vsel %vm489, %v434, 0
      %v1083 = vsel %vm490, %v435, 0
      %v1084 = vsel %vm491, %v436, 0
      %v1085 = vsel %vm492, %v1077, 0
      %v1086 = vld [vmem:[%s298 + $0xc0] sm:$0xf]
      %v1087 = vld [vmem:[%s298 + $0xc4] sm:$0xf]
      %v1088 = vld [vmem:[%s298 + $0xc8] sm:$0xf]
      %v1089 = vld [vmem:[%s298 + $0xcc] sm:$0xf]
      %v1090 = vld [vmem:[%s298 + $0xd0] sm:$0xf]
      %v1091 = vld [vmem:[%s298 + $0xd4] sm:$0xf]
      %v1092 = vld [vmem:[%s298 + $0xd8] sm:$0xf]
      %v1093 = vld [vmem:[%s298 + $0xdc] sm:$0xf]
      %v1094 = vld [vmem:[%s298 + $0xe0] sm:$0xf]
      %v1095 = vld [vmem:[%s298 + $0xe4] sm:$0xf]
      %v1096 = vld [vmem:[%s298 + $0xe8] sm:$0xf]
      %v1097 = vld [vmem:[%s298 + $0xec] sm:$0xf]
      %v1098 = vld [vmem:[%s298 + $0xf0] sm:$0xf]
      %v1099 = vld [vmem:[%s298 + $0xf4] sm:$0xf]
      %v1100 = vld [vmem:[%s298 + $0xf8] sm:$0xf]
      %v1101 = vld [vmem:[%s298 + $0xfc] sm:$0xf]
      %v1110 = vunpack.c.l.b16 %v1078
      %v1111 = vunpack.c.l.b16 %v1079
      %v1112 = vunpack.c.l.b16 %v1080
      %v1113 = vunpack.c.l.b16 %v1081
      %v1114 = vunpack.c.l.b16 %v1082
      %v1115 = vunpack.c.l.b16 %v1083
      %v1116 = vunpack.c.l.b16 %v1084
      %v1117 = vunpack.c.l.b16 %v1085
      %v1118 = vpack.c.b16 %v1111, %v1110
      %v1119 = vpack.c.b16 %v1113, %v1112
      %v1120 = vpack.c.b16 %v1115, %v1114
      %v1121 = vpack.c.b16 %v1117, %v1116
      %v1142 = vunpack.c.l.b16 %v1086
      %v1143 = vunpack.c.l.b16 %v1087
      %v1144 = vunpack.c.l.b16 %v1088
      %v1145 = vunpack.c.l.b16 %v1089
      %v1146 = vunpack.c.l.b16 %v1090
      %v1147 = vunpack.c.l.b16 %v1091
      %v1148 = vunpack.c.l.b16 %v1092
      %v1149 = vunpack.c.l.b16 %v1093
      %v1150 = vunpack.c.l.b16 %v1094
      %v1151 = vunpack.c.l.b16 %v1095
      %v1152 = vunpack.c.l.b16 %v1096
      %v1153 = vunpack.c.l.b16 %v1097
      %v1154 = vunpack.c.l.b16 %v1098
      %v1155 = vunpack.c.l.b16 %v1099
      %v1156 = vunpack.c.l.b16 %v1100
      %v1157 = vunpack.c.l.b16 %v1101
      %v1158 = vpack.c.b16 %v1143, %v1142
      %v1159 = vpack.c.b16 %v1145, %v1144
      %v1160 = vpack.c.b16 %v1147, %v1146
      %v1161 = vpack.c.b16 %v1149, %v1148
      %v1162 = vpack.c.b16 %v1151, %v1150
      %v1163 = vpack.c.b16 %v1153, %v1152
      %v1164 = vpack.c.b16 %v1155, %v1154
      %v1165 = vpack.c.b16 %v1157, %v1156
      %1174 = vmatpush.bf16.msra.mxu0 %v1165
      %1175 = vmatpush.bf16.msra.mxu0 %v1164
      %1176 = vmatpush.bf16.msra.mxu0 %v1163
      %1177 = vmatpush.bf16.msra.mxu0 %v1162
      %1178 = vmatpush.bf16.msra.mxu0 %v1161
      %1179 = vmatpush.bf16.msra.mxu0 %v1160
      %1180 = vmatpush.bf16.msra.mxu0 %v1159
      %1181 = vmatpush.bf16.msra.mxu0 %v1158
      %1182 = vmatmul.bf16.gmra.mxu0 %v1118
      %v1183 = vpop.f32.mrf.mxu0
      %v1184 = vadd.f32 0.0, %v1183
      %v1185 = vpop.f32.mrf.mxu0
      %v1186 = vadd.f32 0.0, %v1185
      %1187 = vmatmul.bf16.gmra.mxu0 %v1119
      %v1188 = vpop.f32.mrf.mxu0
      %v1189 = vadd.f32 0.0, %v1188
      %v1190 = vpop.f32.mrf.mxu0
      %v1191 = vadd.f32 0.0, %v1190
      %1192 = vmatmul.bf16.gmra.mxu0 %v1120
      %v1193 = vpop.f32.mrf.mxu0
      %v1194 = vadd.f32 0.0, %v1193
      %v1195 = vpop.f32.mrf.mxu0
      %v1196 = vadd.f32 0.0, %v1195
      %1197 = vmatmul.bf16.gmra.mxu0 %v1121
      %v1198 = vpop.f32.mrf.mxu0
      %v1199 = vadd.f32 0.0, %v1198
      %v1200 = vpop.f32.mrf.mxu0
      %v1201 = vadd.f32 0.0, %v1200
      %1202 = vdwg.mxu0
      %v1203 = vadd.f32 %v1069, %v1184
      %v1204 = vadd.f32 %v1070, %v1186
      %v1205 = vadd.f32 %v1071, %v1189
      %v1206 = vadd.f32 %v1072, %v1191
      %v1207 = vadd.f32 %v1073, %v1194
      %v1208 = vadd.f32 %v1074, %v1196
      %v1209 = vadd.f32 %v1075, %v1199
      %v1210 = vadd.f32 %v1076, %v1201
      %v1211 = vld [vmem:[%s294 + $0x4] sm:$0xf]
      %v1212 = vld [vmem:[%s294 + $0x8] sm:$0xf]
      %v1213 = vld [vmem:[%s294 + $0xc] sm:$0xf]
      %v1214 = vld [vmem:[%s294 + $0x10] sm:$0xf]
      %v1215 = vld [vmem:[%s294 + $0x14] sm:$0xf]
      %v1216 = vld [vmem:[%s294 + $0x18] sm:$0xf]
      %v1217 = vld [vmem:[%s294 + $0x1c] sm:$0xf]
      %v1218 = vld [vmem:[%s294 + $0x20] sm:$0xf]
      %v1219 = vld [vmem:[%s294 + $0x24] sm:$0x1]
      %v1220 = vld [vmem:[%s298 + $0x100] sm:$0xf]
      %v1221 = vld [vmem:[%s298 + $0x104] sm:$0xf]
      %v1222 = vld [vmem:[%s298 + $0x108] sm:$0xf]
      %v1223 = vld [vmem:[%s298 + $0x10c] sm:$0xf]
      %v1224 = vld [vmem:[%s298 + $0x110] sm:$0xf]
      %v1225 = vld [vmem:[%s298 + $0x114] sm:$0xf]
      %v1226 = vld [vmem:[%s298 + $0x118] sm:$0xf]
      %v1227 = vld [vmem:[%s298 + $0x11c] sm:$0xf]
      %v1228 = vld [vmem:[%s298 + $0x120] sm:$0xf]
      %v1229 = vld [vmem:[%s298 + $0x124] sm:$0xf]
      %v1230 = vld [vmem:[%s298 + $0x128] sm:$0xf]
      %v1231 = vld [vmem:[%s298 + $0x12c] sm:$0xf]
      %v1232 = vld [vmem:[%s298 + $0x130] sm:$0xf]
      %v1233 = vld [vmem:[%s298 + $0x134] sm:$0xf]
      %v1234 = vld [vmem:[%s298 + $0x138] sm:$0xf]
      %v1235 = vld [vmem:[%s298 + $0x13c] sm:$0xf]
      %v1245 = vunpack.c.l.b16 %v1211
      %v1246 = vunpack.c.l.b16 %v1212
      %v1247 = vunpack.c.l.b16 %v1213
      %v1248 = vunpack.c.l.b16 %v1214
      %v1249 = vunpack.c.l.b16 %v1215
      %v1250 = vunpack.c.l.b16 %v1216
      %v1251 = vunpack.c.l.b16 %v1217
      %v1252 = vunpack.c.l.b16 %v1218
      %v1253 = vunpack.c.l.b16 %v1219
      %v1254 = vpack.c.b16 %v1246, %v1245
      %v1255 = vpack.c.b16 %v1248, %v1247
      %v1256 = vpack.c.b16 %v1250, %v1249
      %v1257 = vpack.c.b16 %v1252, %v1251
      %v1258 = vpack.c.b16 %v1253, %v1253
      %v1260 = vshrl.u32 %v1254, 16
      %v1262 = vshll.u32 %v1254, 16
      %v1264 = vrot.slane %v1262, 1
      %v1265 = vor.u32 %v1260, %v1264
      %v1267 = vshll.u32 %v1255, 16
      %v1269 = vrot.slane %v1267, 1
      %v1270 = vsel %vm557, %v1265, %v1269
      %v1271 = vshrl.u32 %v1255, 16
      %v1273 = vor.u32 %v1271, %v1269
      %v1275 = vshll.u32 %v1256, 16
      %v1277 = vrot.slane %v1275, 1
      %v1278 = vsel %vm557, %v1273, %v1277
      %v1279 = vshrl.u32 %v1256, 16
      %v1281 = vor.u32 %v1279, %v1277
      %v1283 = vshll.u32 %v1257, 16
      %v1285 = vrot.slane %v1283, 1
      %v1286 = vsel %vm557, %v1281, %v1285
      %v1287 = vshrl.u32 %v1257, 16
      %v1289 = vor.u32 %v1287, %v1285
      %v1291 = vshll.u32 %v1258, 16
      %v1293 = vrot.slane %v1291, 1
      %v1294 = vsel %vm557, %v1289, %v1293
      %v1315 = vunpack.c.l.b16 %v1220
      %v1316 = vunpack.c.l.b16 %v1221
      %v1317 = vunpack.c.l.b16 %v1222
      %v1318 = vunpack.c.l.b16 %v1223
      %v1319 = vunpack.c.l.b16 %v1224
      %v1320 = vunpack.c.l.b16 %v1225
      %v1321 = vunpack.c.l.b16 %v1226
      %v1322 = vunpack.c.l.b16 %v1227
      %v1323 = vunpack.c.l.b16 %v1228
      %v1324 = vunpack.c.l.b16 %v1229
      %v1325 = vunpack.c.l.b16 %v1230
      %v1326 = vunpack.c.l.b16 %v1231
      %v1327 = vunpack.c.l.b16 %v1232
      %v1328 = vunpack.c.l.b16 %v1233
      %v1329 = vunpack.c.l.b16 %v1234
      %v1330 = vunpack.c.l.b16 %v1235
      %v1331 = vpack.c.b16 %v1316, %v1315
      %v1332 = vpack.c.b16 %v1318, %v1317
      %v1333 = vpack.c.b16 %v1320, %v1319
      %v1334 = vpack.c.b16 %v1322, %v1321
      %v1335 = vpack.c.b16 %v1324, %v1323
      %v1336 = vpack.c.b16 %v1326, %v1325
      %v1337 = vpack.c.b16 %v1328, %v1327
      %v1338 = vpack.c.b16 %v1330, %v1329
      %1347 = vmatpush.bf16.msra.mxu0 %v1338
      %1348 = vmatpush.bf16.msra.mxu0 %v1337
      %1349 = vmatpush.bf16.msra.mxu0 %v1336
      %1350 = vmatpush.bf16.msra.mxu0 %v1335
      %1351 = vmatpush.bf16.msra.mxu0 %v1334
      %1352 = vmatpush.bf16.msra.mxu0 %v1333
      %1353 = vmatpush.bf16.msra.mxu0 %v1332
      %1354 = vmatpush.bf16.msra.mxu0 %v1331
      %1355 = vmatmul.bf16.gmra.mxu0 %v1270
      %v1356 = vpop.f32.mrf.mxu0
      %v1357 = vadd.f32 0.0, %v1356
      %v1358 = vpop.f32.mrf.mxu0
      %v1359 = vadd.f32 0.0, %v1358
      %1360 = vmatmul.bf16.gmra.mxu0 %v1278
      %v1361 = vpop.f32.mrf.mxu0
      %v1362 = vadd.f32 0.0, %v1361
      %v1363 = vpop.f32.mrf.mxu0
      %v1364 = vadd.f32 0.0, %v1363
      %1365 = vmatmul.bf16.gmra.mxu0 %v1286
      %v1366 = vpop.f32.mrf.mxu0
      %v1367 = vadd.f32 0.0, %v1366
      %v1368 = vpop.f32.mrf.mxu0
      %v1369 = vadd.f32 0.0, %v1368
      %1370 = vmatmul.bf16.gmra.mxu0 %v1294
      %v1371 = vpop.f32.mrf.mxu0
      %v1372 = vadd.f32 0.0, %v1371
      %v1373 = vpop.f32.mrf.mxu0
      %v1374 = vadd.f32 0.0, %v1373
      %1375 = vdwg.mxu0
      %v1376 = vadd.f32 %v1203, %v1357
      %v1377 = vadd.f32 %v1204, %v1359
      %v1378 = vadd.f32 %v1205, %v1362
      %v1379 = vadd.f32 %v1206, %v1364
      %v1380 = vadd.f32 %v1207, %v1367
      %v1381 = vadd.f32 %v1208, %v1369
      %v1382 = vadd.f32 %v1209, %v1372
      %v1383 = vadd.f32 %v1210, %v1374
      %v1384 = vld [vmem:[%s294 + $0x4] sm:$0xe]
      %v1385 = vsel %vm873, %v1384, 0
      %v1386 = vsel %vm880, %v1212, 0
      %v1387 = vsel %vm887, %v1213, 0
      %v1388 = vsel %vm894, %v1214, 0
      %v1389 = vsel %vm901, %v1215, 0
      %v1390 = vsel %vm908, %v1216, 0
      %v1391 = vsel %vm915, %v1217, 0
      %v1392 = vsel %vm922, %v1218, 0
      %v1393 = vsel %vm929, %v1219, 0
      %v1394 = vld [vmem:[%s298 + $0x140] sm:$0xf]
      %v1395 = vld [vmem:[%s298 + $0x144] sm:$0xf]
      %v1396 = vld [vmem:[%s298 + $0x148] sm:$0xf]
      %v1397 = vld [vmem:[%s298 + $0x14c] sm:$0xf]
      %v1398 = vld [vmem:[%s298 + $0x150] sm:$0xf]
      %v1399 = vld [vmem:[%s298 + $0x154] sm:$0xf]
      %v1400 = vld [vmem:[%s298 + $0x158] sm:$0xf]
      %v1401 = vld [vmem:[%s298 + $0x15c] sm:$0xf]
      %v1402 = vld [vmem:[%s298 + $0x160] sm:$0xf]
      %v1403 = vld [vmem:[%s298 + $0x164] sm:$0xf]
      %v1404 = vld [vmem:[%s298 + $0x168] sm:$0xf]
      %v1405 = vld [vmem:[%s298 + $0x16c] sm:$0xf]
      %v1406 = vld [vmem:[%s298 + $0x170] sm:$0xf]
      %v1407 = vld [vmem:[%s298 + $0x174] sm:$0xf]
      %v1408 = vld [vmem:[%s298 + $0x178] sm:$0xf]
      %v1409 = vld [vmem:[%s298 + $0x17c] sm:$0xf]
      %v1419 = vunpack.c.l.b16 %v1385
      %v1420 = vunpack.c.l.b16 %v1386
      %v1421 = vunpack.c.l.b16 %v1387
      %v1422 = vunpack.c.l.b16 %v1388
      %v1423 = vunpack.c.l.b16 %v1389
      %v1424 = vunpack.c.l.b16 %v1390
      %v1425 = vunpack.c.l.b16 %v1391
      %v1426 = vunpack.c.l.b16 %v1392
      %v1427 = vunpack.c.l.b16 %v1393
      %v1428 = vpack.c.b16 %v1420, %v1419
      %v1429 = vpack.c.b16 %v1422, %v1421
      %v1430 = vpack.c.b16 %v1424, %v1423
      %v1431 = vpack.c.b16 %v1426, %v1425
      %v1432 = vpack.c.b16 %v1427, %v1427
      %v1433 = vrot.slane %v1428, 1
      %v1434 = vrot.slane %v1429, 1
      %v1435 = vsel %vm978, %v1433, %v1434
      %v1436 = vrot.slane %v1430, 1
      %v1437 = vsel %vm978, %v1434, %v1436
      %v1438 = vrot.slane %v1431, 1
      %v1439 = vsel %vm978, %v1436, %v1438
      %v1440 = vrot.slane %v1432, 1
      %v1441 = vsel %vm978, %v1438, %v1440
      %v1462 = vunpack.c.l.b16 %v1394
      %v1463 = vunpack.c.l.b16 %v1395
      %v1464 = vunpack.c.l.b16 %v1396
      %v1465 = vunpack.c.l.b16 %v1397
      %v1466 = vunpack.c.l.b16 %v1398
      %v1467 = vunpack.c.l.b16 %v1399
      %v1468 = vunpack.c.l.b16 %v1400
      %v1469 = vunpack.c.l.b16 %v1401
      %v1470 = vunpack.c.l.b16 %v1402
      %v1471 = vunpack.c.l.b16 %v1403
      %v1472 = vunpack.c.l.b16 %v1404
      %v1473 = vunpack.c.l.b16 %v1405
      %v1474 = vunpack.c.l.b16 %v1406
      %v1475 = vunpack.c.l.b16 %v1407
      %v1476 = vunpack.c.l.b16 %v1408
      %v1477 = vunpack.c.l.b16 %v1409
      %v1478 = vpack.c.b16 %v1463, %v1462
      %v1479 = vpack.c.b16 %v1465, %v1464
      %v1480 = vpack.c.b16 %v1467, %v1466
      %v1481 = vpack.c.b16 %v1469, %v1468
      %v1482 = vpack.c.b16 %v1471, %v1470
      %v1483 = vpack.c.b16 %v1473, %v1472
      %v1484 = vpack.c.b16 %v1475, %v1474
      %v1485 = vpack.c.b16 %v1477, %v1476
      %1494 = vmatpush.bf16.msra.mxu0 %v1485
      %1495 = vmatpush.bf16.msra.mxu0 %v1484
      %1496 = vmatpush.bf16.msra.mxu0 %v1483
      %1497 = vmatpush.bf16.msra.mxu0 %v1482
      %1498 = vmatpush.bf16.msra.mxu0 %v1481
      %1499 = vmatpush.bf16.msra.mxu0 %v1480
      %1500 = vmatpush.bf16.msra.mxu0 %v1479
      %1501 = vmatpush.bf16.msra.mxu0 %v1478
      %1502 = vmatmul.bf16.gmra.mxu0 %v1435
      %v1503 = vpop.f32.mrf.mxu0
      %v1504 = vadd.f32 0.0, %v1503
      %v1505 = vpop.f32.mrf.mxu0
      %v1506 = vadd.f32 0.0, %v1505
      %1507 = vmatmul.bf16.gmra.mxu0 %v1437
      %v1508 = vpop.f32.mrf.mxu0
      %v1509 = vadd.f32 0.0, %v1508
      %v1510 = vpop.f32.mrf.mxu0
      %v1511 = vadd.f32 0.0, %v1510
      %1512 = vmatmul.bf16.gmra.mxu0 %v1439
      %v1513 = vpop.f32.mrf.mxu0
      %v1514 = vadd.f32 0.0, %v1513
      %v1515 = vpop.f32.mrf.mxu0
      %v1516 = vadd.f32 0.0, %v1515
      %1517 = vmatmul.bf16.gmra.mxu0 %v1441
      %v1518 = vpop.f32.mrf.mxu0
      %v1519 = vadd.f32 0.0, %v1518
      %v1520 = vpop.f32.mrf.mxu0
      %v1521 = vadd.f32 0.0, %v1520
      %1522 = vdwg.mxu0
      %v1523 = vadd.f32 %v1376, %v1504
      %v1524 = vadd.f32 %v1377, %v1506
      %v1525 = vadd.f32 %v1378, %v1509
      %v1526 = vadd.f32 %v1379, %v1511
      %v1527 = vadd.f32 %v1380, %v1514
      %v1528 = vadd.f32 %v1381, %v1516
      %v1529 = vadd.f32 %v1382, %v1519
      %v1530 = vadd.f32 %v1383, %v1521
      %v1531 = vld [vmem:[%s294 + $0x24] sm:$0xf]
      %v1532 = vsel %vm485, %v1212, 0
      %v1533 = vsel %vm486, %v1213, 0
      %v1534 = vsel %vm487, %v1214, 0
      %v1535 = vsel %vm488, %v1215, 0
      %v1536 = vsel %vm489, %v1216, 0
      %v1537 = vsel %vm490, %v1217, 0
      %v1538 = vsel %vm491, %v1218, 0
      %v1539 = vsel %vm492, %v1531, 0
      %v1540 = vld [vmem:[%s298 + $0x180] sm:$0xf]
      %v1541 = vld [vmem:[%s298 + $0x184] sm:$0xf]
      %v1542 = vld [vmem:[%s298 + $0x188] sm:$0xf]
      %v1543 = vld [vmem:[%s298 + $0x18c] sm:$0xf]
      %v1544 = vld [vmem:[%s298 + $0x190] sm:$0xf]
      %v1545 = vld [vmem:[%s298 + $0x194] sm:$0xf]
      %v1546 = vld [vmem:[%s298 + $0x198] sm:$0xf]
      %v1547 = vld [vmem:[%s298 + $0x19c] sm:$0xf]
      %v1548 = vld [vmem:[%s298 + $0x1a0] sm:$0xf]
      %v1549 = vld [vmem:[%s298 + $0x1a4] sm:$0xf]
      %v1550 = vld [vmem:[%s298 + $0x1a8] sm:$0xf]
      %v1551 = vld [vmem:[%s298 + $0x1ac] sm:$0xf]
      %v1552 = vld [vmem:[%s298 + $0x1b0] sm:$0xf]
      %v1553 = vld [vmem:[%s298 + $0x1b4] sm:$0xf]
      %v1554 = vld [vmem:[%s298 + $0x1b8] sm:$0xf]
      %v1555 = vld [vmem:[%s298 + $0x1bc] sm:$0xf]
      %v1564 = vunpack.c.l.b16 %v1532
      %v1565 = vunpack.c.l.b16 %v1533
      %v1566 = vunpack.c.l.b16 %v1534
      %v1567 = vunpack.c.l.b16 %v1535
      %v1568 = vunpack.c.l.b16 %v1536
      %v1569 = vunpack.c.l.b16 %v1537
      %v1570 = vunpack.c.l.b16 %v1538
      %v1571 = vunpack.c.l.b16 %v1539
      %v1572 = vpack.c.b16 %v1565, %v1564
      %v1573 = vpack.c.b16 %v1567, %v1566
      %v1574 = vpack.c.b16 %v1569, %v1568
      %v1575 = vpack.c.b16 %v1571, %v1570
      %v1596 = vunpack.c.l.b16 %v1540
      %v1597 = vunpack.c.l.b16 %v1541
      %v1598 = vunpack.c.l.b16 %v1542
      %v1599 = vunpack.c.l.b16 %v1543
      %v1600 = vunpack.c.l.b16 %v1544
      %v1601 = vunpack.c.l.b16 %v1545
      %v1602 = vunpack.c.l.b16 %v1546
      %v1603 = vunpack.c.l.b16 %v1547
      %v1604 = vunpack.c.l.b16 %v1548
      %v1605 = vunpack.c.l.b16 %v1549
      %v1606 = vunpack.c.l.b16 %v1550
      %v1607 = vunpack.c.l.b16 %v1551
      %v1608 = vunpack.c.l.b16 %v1552
      %v1609 = vunpack.c.l.b16 %v1553
      %v1610 = vunpack.c.l.b16 %v1554
      %v1611 = vunpack.c.l.b16 %v1555
      %v1612 = vpack.c.b16 %v1597, %v1596
      %v1613 = vpack.c.b16 %v1599, %v1598
      %v1614 = vpack.c.b16 %v1601, %v1600
      %v1615 = vpack.c.b16 %v1603, %v1602
      %v1616 = vpack.c.b16 %v1605, %v1604
      %v1617 = vpack.c.b16 %v1607, %v1606
      %v1618 = vpack.c.b16 %v1609, %v1608
      %v1619 = vpack.c.b16 %v1611, %v1610
      %1628 = vmatpush.bf16.msra.mxu0 %v1619
      %1629 = vmatpush.bf16.msra.mxu0 %v1618
      %1630 = vmatpush.bf16.msra.mxu0 %v1617
      %1631 = vmatpush.bf16.msra.mxu0 %v1616
      %1632 = vmatpush.bf16.msra.mxu0 %v1615
      %1633 = vmatpush.bf16.msra.mxu0 %v1614
      %1634 = vmatpush.bf16.msra.mxu0 %v1613
      %1635 = vmatpush.bf16.msra.mxu0 %v1612
      %1636 = vmatmul.bf16.gmra.mxu0 %v1572
      %v1637 = vpop.f32.mrf.mxu0
      %v1638 = vadd.f32 0.0, %v1637
      %v1639 = vpop.f32.mrf.mxu0
      %v1640 = vadd.f32 0.0, %v1639
      %1641 = vmatmul.bf16.gmra.mxu0 %v1573
      %v1642 = vpop.f32.mrf.mxu0
      %v1643 = vadd.f32 0.0, %v1642
      %v1644 = vpop.f32.mrf.mxu0
      %v1645 = vadd.f32 0.0, %v1644
      %1646 = vmatmul.bf16.gmra.mxu0 %v1574
      %v1647 = vpop.f32.mrf.mxu0
      %v1648 = vadd.f32 0.0, %v1647
      %v1649 = vpop.f32.mrf.mxu0
      %v1650 = vadd.f32 0.0, %v1649
      %1651 = vmatmul.bf16.gmra.mxu0 %v1575
      %v1652 = vpop.f32.mrf.mxu0
      %v1653 = vadd.f32 0.0, %v1652
      %v1654 = vpop.f32.mrf.mxu0
      %v1655 = vadd.f32 0.0, %v1654
      %1656 = vdwg.mxu0
      %v1657 = vadd.f32 %v1523, %v1638
      %v1658 = vadd.f32 %v1524, %v1640
      %v1659 = vadd.f32 %v1525, %v1643
      %v1660 = vadd.f32 %v1526, %v1645
      %v1661 = vadd.f32 %v1527, %v1648
      %v1662 = vadd.f32 %v1528, %v1650
      %v1663 = vadd.f32 %v1529, %v1653
      %v1664 = vadd.f32 %v1530, %v1655
      %v1665 = vld [vmem:[%s294 + $0x8] sm:$0xf]
      %v1666 = vld [vmem:[%s294 + $0xc] sm:$0xf]
      %v1667 = vld [vmem:[%s294 + $0x10] sm:$0xf]
      %v1668 = vld [vmem:[%s294 + $0x14] sm:$0xf]
      %v1669 = vld [vmem:[%s294 + $0x18] sm:$0xf]
      %v1670 = vld [vmem:[%s294 + $0x1c] sm:$0xf]
      %v1671 = vld [vmem:[%s294 + $0x20] sm:$0xf]
      %v1672 = vld [vmem:[%s294 + $0x24] sm:$0xf]
      %v1673 = vld [vmem:[%s294 + $0x28] sm:$0x1]
      %v1674 = vld [vmem:[%s298 + $0x1c0] sm:$0xf]
      %v1675 = vld [vmem:[%s298 + $0x1c4] sm:$0xf]
      %v1676 = vld [vmem:[%s298 + $0x1c8] sm:$0xf]
      %v1677 = vld [vmem:[%s298 + $0x1cc] sm:$0xf]
      %v1678 = vld [vmem:[%s298 + $0x1d0] sm:$0xf]
      %v1679 = vld [vmem:[%s298 + $0x1d4] sm:$0xf]
      %v1680 = vld [vmem:[%s298 + $0x1d8] sm:$0xf]
      %v1681 = vld [vmem:[%s298 + $0x1dc] sm:$0xf]
      %v1682 = vld [vmem:[%s298 + $0x1e0] sm:$0xf]
      %v1683 = vld [vmem:[%s298 + $0x1e4] sm:$0xf]
      %v1684 = vld [vmem:[%s298 + $0x1e8] sm:$0xf]
      %v1685 = vld [vmem:[%s298 + $0x1ec] sm:$0xf]
      %v1686 = vld [vmem:[%s298 + $0x1f0] sm:$0xf]
      %v1687 = vld [vmem:[%s298 + $0x1f4] sm:$0xf]
      %v1688 = vld [vmem:[%s298 + $0x1f8] sm:$0xf]
      %v1689 = vld [vmem:[%s298 + $0x1fc] sm:$0xf]
      %v1699 = vunpack.c.l.b16 %v1665
      %v1700 = vunpack.c.l.b16 %v1666
      %v1701 = vunpack.c.l.b16 %v1667
      %v1702 = vunpack.c.l.b16 %v1668
      %v1703 = vunpack.c.l.b16 %v1669
      %v1704 = vunpack.c.l.b16 %v1670
      %v1705 = vunpack.c.l.b16 %v1671
      %v1706 = vunpack.c.l.b16 %v1672
      %v1707 = vunpack.c.l.b16 %v1673
      %v1708 = vpack.c.b16 %v1700, %v1699
      %v1709 = vpack.c.b16 %v1702, %v1701
      %v1710 = vpack.c.b16 %v1704, %v1703
      %v1711 = vpack.c.b16 %v1706, %v1705
      %v1712 = vpack.c.b16 %v1707, %v1707
      %v1714 = vshrl.u32 %v1708, 16
      %v1716 = vshll.u32 %v1708, 16
      %v1718 = vrot.slane %v1716, 1
      %v1719 = vor.u32 %v1714, %v1718
      %v1721 = vshll.u32 %v1709, 16
      %v1723 = vrot.slane %v1721, 1
      %v1724 = vsel %vm557, %v1719, %v1723
      %v1725 = vshrl.u32 %v1709, 16
      %v1727 = vor.u32 %v1725, %v1723
      %v1729 = vshll.u32 %v1710, 16
      %v1731 = vrot.slane %v1729, 1
      %v1732 = vsel %vm557, %v1727, %v1731
      %v1733 = vshrl.u32 %v1710, 16
      %v1735 = vor.u32 %v1733, %v1731
      %v1737 = vshll.u32 %v1711, 16
      %v1739 = vrot.slane %v1737, 1
      %v1740 = vsel %vm557, %v1735, %v1739
      %v1741 = vshrl.u32 %v1711, 16
      %v1743 = vor.u32 %v1741, %v1739
      %v1745 = vshll.u32 %v1712, 16
      %v1747 = vrot.slane %v1745, 1
      %v1748 = vsel %vm557, %v1743, %v1747
      %v1769 = vunpack.c.l.b16 %v1674
      %v1770 = vunpack.c.l.b16 %v1675
      %v1771 = vunpack.c.l.b16 %v1676
      %v1772 = vunpack.c.l.b16 %v1677
      %v1773 = vunpack.c.l.b16 %v1678
      %v1774 = vunpack.c.l.b16 %v1679
      %v1775 = vunpack.c.l.b16 %v1680
      %v1776 = vunpack.c.l.b16 %v1681
      %v1777 = vunpack.c.l.b16 %v1682
      %v1778 = vunpack.c.l.b16 %v1683
      %v1779 = vunpack.c.l.b16 %v1684
      %v1780 = vunpack.c.l.b16 %v1685
      %v1781 = vunpack.c.l.b16 %v1686
      %v1782 = vunpack.c.l.b16 %v1687
      %v1783 = vunpack.c.l.b16 %v1688
      %v1784 = vunpack.c.l.b16 %v1689
      %v1785 = vpack.c.b16 %v1770, %v1769
      %v1786 = vpack.c.b16 %v1772, %v1771
      %v1787 = vpack.c.b16 %v1774, %v1773
      %v1788 = vpack.c.b16 %v1776, %v1775
      %v1789 = vpack.c.b16 %v1778, %v1777
      %v1790 = vpack.c.b16 %v1780, %v1779
      %v1791 = vpack.c.b16 %v1782, %v1781
      %v1792 = vpack.c.b16 %v1784, %v1783
      %1801 = vmatpush.bf16.msra.mxu0 %v1792
      %1802 = vmatpush.bf16.msra.mxu0 %v1791
      %1803 = vmatpush.bf16.msra.mxu0 %v1790
      %1804 = vmatpush.bf16.msra.mxu0 %v1789
      %1805 = vmatpush.bf16.msra.mxu0 %v1788
      %1806 = vmatpush.bf16.msra.mxu0 %v1787
      %1807 = vmatpush.bf16.msra.mxu0 %v1786
      %1808 = vmatpush.bf16.msra.mxu0 %v1785
      %1809 = vmatmul.bf16.gmra.mxu0 %v1724
      %v1810 = vpop.f32.mrf.mxu0
      %v1811 = vadd.f32 0.0, %v1810
      %v1812 = vpop.f32.mrf.mxu0
      %v1813 = vadd.f32 0.0, %v1812
      %1814 = vmatmul.bf16.gmra.mxu0 %v1732
      %v1815 = vpop.f32.mrf.mxu0
      %v1816 = vadd.f32 0.0, %v1815
      %v1817 = vpop.f32.mrf.mxu0
      %v1818 = vadd.f32 0.0, %v1817
      %1819 = vmatmul.bf16.gmra.mxu0 %v1740
      %v1820 = vpop.f32.mrf.mxu0
      %v1821 = vadd.f32 0.0, %v1820
      %v1822 = vpop.f32.mrf.mxu0
      %v1823 = vadd.f32 0.0, %v1822
      %1824 = vmatmul.bf16.gmra.mxu0 %v1748
      %v1825 = vpop.f32.mrf.mxu0
      %v1826 = vadd.f32 0.0, %v1825
      %v1827 = vpop.f32.mrf.mxu0
      %v1828 = vadd.f32 0.0, %v1827
      %1829 = vdwg.mxu0
      %v1830 = vadd.f32 %v1657, %v1811
      %v1831 = vadd.f32 %v1658, %v1813
      %v1832 = vadd.f32 %v1659, %v1816
      %v1833 = vadd.f32 %v1660, %v1818
      %v1834 = vadd.f32 %v1661, %v1821
      %v1835 = vadd.f32 %v1662, %v1823
      %v1836 = vadd.f32 %v1663, %v1826
      %v1837 = vadd.f32 %v1664, %v1828
      %v1838 = vld [vmem:[%s294 + $0x8] sm:$0xe]
      %v1839 = vsel %vm873, %v1838, 0
      %v1840 = vsel %vm880, %v1666, 0
      %v1841 = vsel %vm887, %v1667, 0
      %v1842 = vsel %vm894, %v1668, 0
      %v1843 = vsel %vm901, %v1669, 0
      %v1844 = vsel %vm908, %v1670, 0
      %v1845 = vsel %vm915, %v1671, 0
      %v1846 = vsel %vm922, %v1672, 0
      %v1847 = vsel %vm929, %v1673, 0
      %v1848 = vld [vmem:[%s298 + $0x200] sm:$0xf]
      %v1849 = vld [vmem:[%s298 + $0x204] sm:$0xf]
      %v1850 = vld [vmem:[%s298 + $0x208] sm:$0xf]
      %v1851 = vld [vmem:[%s298 + $0x20c] sm:$0xf]
      %v1852 = vld [vmem:[%s298 + $0x210] sm:$0xf]
      %v1853 = vld [vmem:[%s298 + $0x214] sm:$0xf]
      %v1854 = vld [vmem:[%s298 + $0x218] sm:$0xf]
      %v1855 = vld [vmem:[%s298 + $0x21c] sm:$0xf]
      %v1856 = vld [vmem:[%s298 + $0x220] sm:$0xf]
      %v1857 = vld [vmem:[%s298 + $0x224] sm:$0xf]
      %v1858 = vld [vmem:[%s298 + $0x228] sm:$0xf]
      %v1859 = vld [vmem:[%s298 + $0x22c] sm:$0xf]
      %v1860 = vld [vmem:[%s298 + $0x230] sm:$0xf]
      %v1861 = vld [vmem:[%s298 + $0x234] sm:$0xf]
      %v1862 = vld [vmem:[%s298 + $0x238] sm:$0xf]
      %v1863 = vld [vmem:[%s298 + $0x23c] sm:$0xf]
      %v1873 = vunpack.c.l.b16 %v1839
      %v1874 = vunpack.c.l.b16 %v1840
      %v1875 = vunpack.c.l.b16 %v1841
      %v1876 = vunpack.c.l.b16 %v1842
      %v1877 = vunpack.c.l.b16 %v1843
      %v1878 = vunpack.c.l.b16 %v1844
      %v1879 = vunpack.c.l.b16 %v1845
      %v1880 = vunpack.c.l.b16 %v1846
      %v1881 = vunpack.c.l.b16 %v1847
      %v1882 = vpack.c.b16 %v1874, %v1873
      %v1883 = vpack.c.b16 %v1876, %v1875
      %v1884 = vpack.c.b16 %v1878, %v1877
      %v1885 = vpack.c.b16 %v1880, %v1879
      %v1886 = vpack.c.b16 %v1881, %v1881
      %v1887 = vrot.slane %v1882, 1
      %v1888 = vrot.slane %v1883, 1
      %v1889 = vsel %vm978, %v1887, %v1888
      %v1890 = vrot.slane %v1884, 1
      %v1891 = vsel %vm978, %v1888, %v1890
      %v1892 = vrot.slane %v1885, 1
      %v1893 = vsel %vm978, %v1890, %v1892
      %v1894 = vrot.slane %v1886, 1
      %v1895 = vsel %vm978, %v1892, %v1894
      %v1916 = vunpack.c.l.b16 %v1848
      %v1917 = vunpack.c.l.b16 %v1849
      %v1918 = vunpack.c.l.b16 %v1850
      %v1919 = vunpack.c.l.b16 %v1851
      %v1920 = vunpack.c.l.b16 %v1852
      %v1921 = vunpack.c.l.b16 %v1853
      %v1922 = vunpack.c.l.b16 %v1854
      %v1923 = vunpack.c.l.b16 %v1855
      %v1924 = vunpack.c.l.b16 %v1856
      %v1925 = vunpack.c.l.b16 %v1857
      %v1926 = vunpack.c.l.b16 %v1858
      %v1927 = vunpack.c.l.b16 %v1859
      %v1928 = vunpack.c.l.b16 %v1860
      %v1929 = vunpack.c.l.b16 %v1861
      %v1930 = vunpack.c.l.b16 %v1862
      %v1931 = vunpack.c.l.b16 %v1863
      %v1932 = vpack.c.b16 %v1917, %v1916
      %v1933 = vpack.c.b16 %v1919, %v1918
      %v1934 = vpack.c.b16 %v1921, %v1920
      %v1935 = vpack.c.b16 %v1923, %v1922
      %v1936 = vpack.c.b16 %v1925, %v1924
      %v1937 = vpack.c.b16 %v1927, %v1926
      %v1938 = vpack.c.b16 %v1929, %v1928
      %v1939 = vpack.c.b16 %v1931, %v1930
      %1948 = vmatpush.bf16.msra.mxu0 %v1939
      %1949 = vmatpush.bf16.msra.mxu0 %v1938
      %1950 = vmatpush.bf16.msra.mxu0 %v1937
      %1951 = vmatpush.bf16.msra.mxu0 %v1936
      %1952 = vmatpush.bf16.msra.mxu0 %v1935
      %1953 = vmatpush.bf16.msra.mxu0 %v1934
      %1954 = vmatpush.bf16.msra.mxu0 %v1933
      %1955 = vmatpush.bf16.msra.mxu0 %v1932
      %1956 = vmatmul.bf16.gmra.mxu0 %v1889
      %v1957 = vpop.f32.mrf.mxu0
      %v1958 = vadd.f32 0.0, %v1957
      %v1959 = vpop.f32.mrf.mxu0
      %v1960 = vadd.f32 0.0, %v1959
      %1961 = vmatmul.bf16.gmra.mxu0 %v1891
      %v1962 = vpop.f32.mrf.mxu0
      %v1963 = vadd.f32 0.0, %v1962
      %v1964 = vpop.f32.mrf.mxu0
      %v1965 = vadd.f32 0.0, %v1964
      %1966 = vmatmul.bf16.gmra.mxu0 %v1893
      %v1967 = vpop.f32.mrf.mxu0
      %v1968 = vadd.f32 0.0, %v1967
      %v1969 = vpop.f32.mrf.mxu0
      %v1970 = vadd.f32 0.0, %v1969
      %1971 = vmatmul.bf16.gmra.mxu0 %v1895
      %v1972 = vpop.f32.mrf.mxu0
      %v1973 = vadd.f32 0.0, %v1972
      %v1974 = vpop.f32.mrf.mxu0
      %v1975 = vadd.f32 0.0, %v1974
      %1976 = vdwg.mxu0
      %v1977 = vadd.f32 %v1830, %v1958
      %v1978 = vadd.f32 %v1831, %v1960
      %v1979 = vadd.f32 %v1832, %v1963
      %v1980 = vadd.f32 %v1833, %v1965
      %v1981 = vadd.f32 %v1834, %v1968
      %v1982 = vadd.f32 %v1835, %v1970
      %v1983 = vadd.f32 %v1836, %v1973
      %v1984 = vadd.f32 %v1837, %v1975
      %v1985 = vld [vmem:[%s301] sm:$0x1]
      %v1987 = vperm.slane %v1985, 0
      %v1989 = vmul.f32 %v1977, %v1987
      %v1990 = vmul.f32 %v1978, %v1987
      %v1991 = vmul.f32 %v1979, %v1987
      %v1992 = vmul.f32 %v1980, %v1987
      %v1993 = vmul.f32 %v1981, %v1987
      %v1994 = vmul.f32 %v1982, %v1987
      %v1995 = vmul.f32 %v1983, %v1987
      %v1996 = vmul.f32 %v1984, %v1987
      %v1997 = vld [vmem:[%s304] sm:$0x1]
      %v1999 = vperm.slane %v1997, 0
      %v2001 = vadd.f32 %v1989, %v1999
      %v2002 = vadd.f32 %v1990, %v1999
      %v2003 = vadd.f32 %v1991, %v1999
      %v2004 = vadd.f32 %v1992, %v1999
      %v2005 = vadd.f32 %v1993, %v1999
      %v2006 = vadd.f32 %v1994, %v1999
      %v2007 = vadd.f32 %v1995, %v1999
      %v2008 = vadd.f32 %v1996, %v1999
      %v2009 = vld [vmem:[%s312] sm:$0xff]
      %v2010 = vld [vmem:[%s312 + $0x8] sm:$0xff]
      %v2011 = vld [vmem:[%s312 + $0x10] sm:$0xff]
      %v2012 = vld [vmem:[%s312 + $0x18] sm:$0xff]
      %v2013 = vld [vmem:[%s312 + $0x20] sm:$0xff]
      %v2014 = vld [vmem:[%s312 + $0x28] sm:$0xff]
      %v2015 = vld [vmem:[%s312 + $0x30] sm:$0xff]
      %v2016 = vld [vmem:[%s312 + $0x38] sm:$0xff]
      %v2017 = vadd.f32 %v2001, %v2009
      %v2018 = vadd.f32 %v2002, %v2010
      %v2019 = vadd.f32 %v2003, %v2011
      %v2020 = vadd.f32 %v2004, %v2012
      %v2021 = vadd.f32 %v2005, %v2013
      %v2022 = vadd.f32 %v2006, %v2014
      %v2023 = vadd.f32 %v2007, %v2015
      %v2024 = vadd.f32 %v2008, %v2016
      %v2025 = vmax.f32 %v2017, 0.0
      %v2026 = vmax.f32 %v2018, 0.0
      %v2027 = vmax.f32 %v2019, 0.0
      %v2028 = vmax.f32 %v2020, 0.0
      %v2029 = vmax.f32 %v2021, 0.0
      %v2030 = vmax.f32 %v2022, 0.0
      %v2031 = vmax.f32 %v2023, 0.0
      %v2032 = vmax.f32 %v2024, 0.0
      %2033 = vst [vmem:[%s320] sm:$0xff] %v2025
      %2034 = vst [vmem:[%s320 + $0x8] sm:$0xff] %v2026
      %2035 = vst [vmem:[%s320 + $0x10] sm:$0xff] %v2027
      %2036 = vst [vmem:[%s320 + $0x18] sm:$0xff] %v2028
      %2037 = vst [vmem:[%s320 + $0x20] sm:$0xff] %v2029
      %2038 = vst [vmem:[%s320 + $0x28] sm:$0xff] %v2030
      %2039 = vst [vmem:[%s320 + $0x30] sm:$0xff] %v2031
      %2040 = vst [vmem:[%s320 + $0x38] sm:$0xff] %v2032
      %p2041 = scmp.lt.s32.totalorder %s21, 1
      %s2042 = scalar_select %p2041, %s21, 1
      %p2043 = scmp.lt.s32.totalorder %s20, 0
      %s2044 = scalar_select %p2043, %s20, 0
      %s2045 = smul.addr %s2042, 8
      %s2046 = sadd.s32 %s2044, %s2045
      %s2047 = smul.addr %s2046, 8
      %s2048 = scalar_lea.vmem %s5, %s2047
      // Predicated region
      $region41: #{basic_block_forward.5} parent=39 // pred_check
        %p2049 = pneg %p180
      $region42: #{basic_block_forward.5} parent=39 // pred_check_branch
        %2051 = sbr.rel (%p2049) target = $region44
      $region43: #{basic_block_forward.5} parent=39 // pred_region
        _
      $region44: #{basic_block_forward.5} parent=39 // pred_fallthru
        _
    $region40: #{basic_block_forward.5} parent=5 // pred_fallthru
      _
    %p2052 = scmp.le.s32.totalorder 2, %s11
    // Predicated region
    $region45: #{basic_block_forward.5} parent=5 // pred_check
      %p2053 = pneg %p2052
    $region46: #{basic_block_forward.5} parent=5 // pred_check_branch
      %2055 = sbr.rel (%p2053) target = $region48
    $region47: #{basic_block_forward.5} parent=5 // pred_region
      %s2056 = ssub.s32 %s11, 2
      // Predicated region
      $region49: #{basic_block_forward.5} parent=47 // pred_check
        %p2057 = pneg %p186
      $region50: #{basic_block_forward.5} parent=47 // pred_check_branch
        %2059 = sbr.rel (%p2057) target = $region52
      $region51: #{basic_block_forward.5} parent=47 // pred_region
        %p2060 = scmp.lt.s32.totalorder %s23, 1
        %s2061 = scalar_select %p2060, %s23, 1
        %p2062 = scmp.lt.s32.totalorder %s22, 0
        %s2063 = scalar_select %p2062, %s22, 0
        %s2064 = smul.addr %s2061, 8
        %s2065 = sadd.s32 %s2063, %s2064
        %s2066 = smul.addr %s2065, 8
        %s2067 = scalar_lea.vmem %s5, %s2066
      $region52: #{basic_block_forward.5} parent=47 // pred_fallthru
        _
    $region48: #{basic_block_forward.5} parent=5 // pred_fallthru
      _
  $region6: #{basic_block_forward.5} parent=0 // loop_footer
    %s15 = sadd.s32 1, %s11
  $region7: #{basic_block_forward.5} parent=0 // loop_footer_branch
    %10 = sbr.rel target = $region3
  $region8: #{basic_block_forward.5} parent=0 // loop_exit
    _

</llo_original>
